<compile_context>
chip_gen: v5e
topology: v5e:2x2
jax: 0.10.0
libtpu: 0.0.40
codegen_flags: <defaults>
</compile_context>

<pallas_src>
import jax
import jax.numpy as jnp
from jax.experimental import pallas as pl
from jax.experimental.pallas import tpu as pltpu

KSIZE = 3
STRIDE = 2


def fused_synthesis_kernel(xt_ref,
                           w1_ref, s1_ref, b1_ref,
                           w2_ref, s2_ref, b2_ref,
                           w3_ref, s3_ref, b3_ref,
                           y_ref):
    # xt_ref : (N*L0, Ci0)               channels-in-lanes, batch folded into sublanes
    # wX_ref : (K, Ci, Co)               per-tap transposed weights (W_k^T)
    # sX_ref : (K, N*Lout, N*L)          per-tap block-diagonal 0/1 scatter matrices
    # bX_ref : (1, Co)                   bias
    # y_ref  : (N*Lout3, Co3)
    def deconv_relu(h, w_ref, s_ref, b_ref):
        acc = None
        for k in range(KSIZE):
            z = jnp.dot(h, w_ref[k], preferred_element_type=jnp.float32)       # (N*L, Co)
            yk = jnp.dot(s_ref[k], z, preferred_element_type=jnp.float32)      # (N*Lout, Co)
            acc = yk if acc is None else acc + yk
        return jnp.maximum(acc + b_ref[...], 0.0)

    h = xt_ref[...]
    h = deconv_relu(h, w1_ref, s1_ref, b1_ref)
    h = deconv_relu(h, w2_ref, s2_ref, b2_ref)
    h = deconv_relu(h, w3_ref, s3_ref, b3_ref)
    y_ref[...] = h.astype(y_ref.dtype)


def make_scatter_taps(N, L, k=KSIZE, stride=STRIDE, dtype=jnp.float32):
    """Per-tap block-diagonal scatter: S_k[n*Lout + stride*l + k, n*L + l] = 1."""
    Lout = (L - 1) * stride + k
    n_idx = jnp.arange(N)[:, None]
    l_idx = jnp.arange(L)[None, :]
    cols = (n_idx * L + l_idx).reshape(-1)                      # (N*L,)
    mats = []
    for kk in range(k):
        rows = (n_idx * Lout + stride * l_idx + kk).reshape(-1)  # (N*L,)
        mats.append(jnp.zeros((N * Lout, N * L), dtype).at[rows, cols].set(1.0))
    return jnp.stack(mats), Lout                                 # (K, N*Lout, N*L), Lout


def synthesis_net(x, params):
    """x: (N, Ci, L) f32; params: [(w, b)] with w: (Ci, Co, K) (PyTorch layout), b: (Co,)."""
    N, Ci0, L0 = x.shape

    # (N, Ci, L) -> (N*L, Ci): channels in lanes, batch folded into sublanes.
    xt = jnp.transpose(x, (0, 2, 1)).reshape(N * L0, Ci0)

    kernel_args = [xt]
    in_specs = [pl.BlockSpec((N * L0, Ci0), lambda i: (0, 0))]

    L = L0
    co_last = None
    for (w, b) in params:
        ci, co, k = w.shape
        w_taps = jnp.transpose(w, (2, 0, 1))       # (K, Ci, Co): w_taps[k] == W_k^T
        s_taps, Lout = make_scatter_taps(N, L)     # (K, N*Lout, N*L)
        b2 = b.reshape(1, co)

        kernel_args += [w_taps, s_taps, b2]
        in_specs += [
            pl.BlockSpec((k, ci, co), lambda i: (0, 0, 0)),
            pl.BlockSpec((k, N * Lout, N * L), lambda i: (0, 0, 0)),
            pl.BlockSpec((1, co), lambda i: (0, 0)),
        ]
        L = Lout
        co_last = co

    out_flat = pl.pallas_call(
        fused_synthesis_kernel,
        out_shape=jax.ShapeDtypeStruct((N * L, co_last), jnp.float32),
        grid_spec=pltpu.PrefetchScalarGridSpec(
            num_scalar_prefetch=0,
            grid=(1,),
            in_specs=in_specs,
            out_specs=pl.BlockSpec((N * L, co_last), lambda i: (0, 0)),
        ),
        compiler_params=pltpu.CompilerParams(
            dimension_semantics=("arbitrary",),
        ),
        # Tiny, launch-overhead-dominated kernel: tell XLA it is cheap.
        cost_estimate=pl.CostEstimate(
            flops=10_500_000, transcendentals=0, bytes_accessed=750_000),
    )(*kernel_args)

    # (N*Lout, Co) -> (N, Co, Lout) to match PyTorch's NCW output convention.
    return jnp.transpose(out_flat.reshape(N, L, co_last), (0, 2, 1))


def init_params(key):
    """Deterministic parameter init matching the module's shapes.

    ConvTranspose1d weight layout: (in_channels, out_channels, kernel_size).
    """
    dims = [(256, 128), (128, 64), (64, 50)]
    params = []
    for i, (ci, co) in enumerate(dims):
        kw, kb = jax.random.split(jax.random.fold_in(key, i))
        bound = 1.0 / jnp.sqrt(ci * KSIZE)
        w = jax.random.uniform(kw, (ci, co, KSIZE), jnp.float32, -bound, bound)
        b = jax.random.uniform(kb, (co,), jnp.float32, -bound, bound)
        params.append((w, b))
    return params


def synthesis_net_ref(x, params):
    """Pure-JAX reference for validation (same math, no Pallas)."""
    for (w, b) in params:
        N, Ci, L = x.shape
        _, Co, k = w.shape
        Lout = (L - 1) * STRIDE + k
        y = jnp.zeros((N, Co, Lout), jnp.float32)
        for kk in range(k):
            contrib = jnp.einsum("ncl,co->nol", x, w[:, :, kk])
            y = y.at[:, :, kk: kk + STRIDE * L: STRIDE].add(contrib)
        x = jnp.maximum(y + b[None, :, None], 0.0)
    return x


if __name__ == "__main__":
    key = jax.random.PRNGKey(0)
    kx, kp = jax.random.split(key)

    # Small input consistent with the module: batch=2, in_channels=256, length=8.
    x = jax.random.normal(kx, (2, 256, 8), jnp.float32)
    params = init_params(kp)

    out = synthesis_net(x, params)
    out = jax.block_until_ready(out)

    ref = synthesis_net_ref(x, params)
    assert out.shape == (2, 50, 71), out.shape
    assert jnp.allclose(out, ref, atol=1e-4, rtol=1e-4), "mismatch vs reference"

    print("KERNEL_OK")
</pallas_src>

<mosaic_0001>
module attributes {stable_mosaic.version = 11 : i64} {
  func.func @fused_synthesis_kernel(%arg0: i32, %arg1: memref<16x256xf32, #tpu.memory_space<vmem>>, %arg2: memref<3x256x128xf32, #tpu.memory_space<vmem>>, %arg3: memref<3x34x16xf32, #tpu.memory_space<vmem>>, %arg4: memref<1x128xf32, #tpu.memory_space<vmem>>, %arg5: memref<3x128x64xf32, #tpu.memory_space<vmem>>, %arg6: memref<3x70x34xf32, #tpu.memory_space<vmem>>, %arg7: memref<1x64xf32, #tpu.memory_space<vmem>>, %arg8: memref<3x64x50xf32, #tpu.memory_space<vmem>>, %arg9: memref<3x142x70xf32, #tpu.memory_space<vmem>>, %arg10: memref<1x50xf32, #tpu.memory_space<vmem>>, %arg11: memref<142x50xf32, #tpu.memory_space<vmem>>) attributes {dimension_semantics = [#tpu.dimension_semantics<arbitrary>], iteration_bounds = array<i64: 1>, scalar_prefetch = 0 : i64, scratch_operands = 0 : i64, tpu.core_type = #tpu.core_type<tc>, window_params = [{pipeline_mode = #tpu.pipeline_mode<synchronous>, transform_indices = @transform_0, window_bounds = array<i64: 16, 256>}, {pipeline_mode = #tpu.pipeline_mode<synchronous>, transform_indices = @transform_1, window_bounds = array<i64: 3, 256, 128>}, {pipeline_mode = #tpu.pipeline_mode<synchronous>, transform_indices = @transform_2, window_bounds = array<i64: 3, 34, 16>}, {pipeline_mode = #tpu.pipeline_mode<synchronous>, transform_indices = @transform_3, window_bounds = array<i64: 1, 128>}, {pipeline_mode = #tpu.pipeline_mode<synchronous>, transform_indices = @transform_4, window_bounds = array<i64: 3, 128, 64>}, {pipeline_mode = #tpu.pipeline_mode<synchronous>, transform_indices = @transform_5, window_bounds = array<i64: 3, 70, 34>}, {pipeline_mode = #tpu.pipeline_mode<synchronous>, transform_indices = @transform_6, window_bounds = array<i64: 1, 64>}, {pipeline_mode = #tpu.pipeline_mode<synchronous>, transform_indices = @transform_7, window_bounds = array<i64: 3, 64, 50>}, {pipeline_mode = #tpu.pipeline_mode<synchronous>, transform_indices = @transform_8, window_bounds = array<i64: 3, 142, 70>}, {pipeline_mode = #tpu.pipeline_mode<synchronous>, transform_indices = @transform_9, window_bounds = array<i64: 1, 50>}, {pipeline_mode = #tpu.pipeline_mode<synchronous>, transform_indices = @transform_10, window_bounds = array<i64: 142, 50>}]} {
    %c0 = arith.constant 0 : index
    %c0_0 = arith.constant 0 : index
    %0 = vector.load %arg1[%c0, %c0_0] : memref<16x256xf32, #tpu.memory_space<vmem>>, vector<16x256xf32>
    %c0_1 = arith.constant 0 : index
    %c0_2 = arith.constant 0 : index
    %c0_3 = arith.constant 0 : index
    %1 = vector.load %arg2[%c0_1, %c0_2, %c0_3] : memref<3x256x128xf32, #tpu.memory_space<vmem>>, vector<1x256x128xf32>
    %2 = vector.shape_cast %1 : vector<1x256x128xf32> to vector<256x128xf32>
    %cst = arith.constant dense<0.000000e+00> : vector<16x128xf32>
    %3 = tpu.matmul %0, %2, %cst {dimension_numbers = #tpu.dot_dimension_numbers<[1], [0], [0], [1], [0, 0, 1, 1], [], []>} : vector<16x256xf32>, vector<256x128xf32>, vector<16x128xf32> -> vector<16x128xf32>
    %c0_4 = arith.constant 0 : index
    %c0_5 = arith.constant 0 : index
    %c0_6 = arith.constant 0 : index
    %4 = vector.load %arg3[%c0_4, %c0_5, %c0_6] : memref<3x34x16xf32, #tpu.memory_space<vmem>>, vector<1x34x16xf32>
    %5 = vector.shape_cast %4 : vector<1x34x16xf32> to vector<34x16xf32>
    %cst_7 = arith.constant dense<0.000000e+00> : vector<34x128xf32>
    %6 = tpu.matmul %5, %3, %cst_7 {dimension_numbers = #tpu.dot_dimension_numbers<[1], [0], [0], [1], [0, 0, 1, 1], [], []>} : vector<34x16xf32>, vector<16x128xf32>, vector<34x128xf32> -> vector<34x128xf32>
    %c1 = arith.constant 1 : index
    %c0_8 = arith.constant 0 : index
    %c0_9 = arith.constant 0 : index
    %7 = vector.load %arg2[%c1, %c0_8, %c0_9] : memref<3x256x128xf32, #tpu.memory_space<vmem>>, vector<1x256x128xf32>
    %8 = vector.shape_cast %7 : vector<1x256x128xf32> to vector<256x128xf32>
    %cst_10 = arith.constant dense<0.000000e+00> : vector<16x128xf32>
    %9 = tpu.matmul %0, %8, %cst_10 {dimension_numbers = #tpu.dot_dimension_numbers<[1], [0], [0], [1], [0, 0, 1, 1], [], []>} : vector<16x256xf32>, vector<256x128xf32>, vector<16x128xf32> -> vector<16x128xf32>
    %c1_11 = arith.constant 1 : index
    %c0_12 = arith.constant 0 : index
    %c0_13 = arith.constant 0 : index
    %10 = vector.load %arg3[%c1_11, %c0_12, %c0_13] : memref<3x34x16xf32, #tpu.memory_space<vmem>>, vector<1x34x16xf32>
    %11 = vector.shape_cast %10 : vector<1x34x16xf32> to vector<34x16xf32>
    %cst_14 = arith.constant dense<0.000000e+00> : vector<34x128xf32>
    %12 = tpu.matmul %11, %9, %cst_14 {dimension_numbers = #tpu.dot_dimension_numbers<[1], [0], [0], [1], [0, 0, 1, 1], [], []>} : vector<34x16xf32>, vector<16x128xf32>, vector<34x128xf32> -> vector<34x128xf32>
    %13 = arith.addf %6, %12 : vector<34x128xf32>
    %c2 = arith.constant 2 : index
    %c0_15 = arith.constant 0 : index
    %c0_16 = arith.constant 0 : index
    %14 = vector.load %arg2[%c2, %c0_15, %c0_16] : memref<3x256x128xf32, #tpu.memory_space<vmem>>, vector<1x256x128xf32>
    %15 = vector.shape_cast %14 : vector<1x256x128xf32> to vector<256x128xf32>
    %cst_17 = arith.constant dense<0.000000e+00> : vector<16x128xf32>
    %16 = tpu.matmul %0, %15, %cst_17 {dimension_numbers = #tpu.dot_dimension_numbers<[1], [0], [0], [1], [0, 0, 1, 1], [], []>} : vector<16x256xf32>, vector<256x128xf32>, vector<16x128xf32> -> vector<16x128xf32>
    %c2_18 = arith.constant 2 : index
    %c0_19 = arith.constant 0 : index
    %c0_20 = arith.constant 0 : index
    %17 = vector.load %arg3[%c2_18, %c0_19, %c0_20] : memref<3x34x16xf32, #tpu.memory_space<vmem>>, vector<1x34x16xf32>
    %18 = vector.shape_cast %17 : vector<1x34x16xf32> to vector<34x16xf32>
    %cst_21 = arith.constant dense<0.000000e+00> : vector<34x128xf32>
    %19 = tpu.matmul %18, %16, %cst_21 {dimension_numbers = #tpu.dot_dimension_numbers<[1], [0], [0], [1], [0, 0, 1, 1], [], []>} : vector<34x16xf32>, vector<16x128xf32>, vector<34x128xf32> -> vector<34x128xf32>
    %20 = arith.addf %13, %19 : vector<34x128xf32>
    %c0_22 = arith.constant 0 : index
    %c0_23 = arith.constant 0 : index
    %21 = vector.load %arg4[%c0_22, %c0_23] : memref<1x128xf32, #tpu.memory_space<vmem>>, vector<1x128xf32>
    %22 = vector.broadcast %21 : vector<1x128xf32> to vector<34x128xf32>
    %23 = arith.addf %20, %22 : vector<34x128xf32>
    %cst_24 = arith.constant 0.000000e+00 : f32
    %24 = vector.broadcast %cst_24 : f32 to vector<34x128xf32>
    %25 = arith.maximumf %23, %24 : vector<34x128xf32>
    %c0_25 = arith.constant 0 : index
    %c0_26 = arith.constant 0 : index
    %c0_27 = arith.constant 0 : index
    %26 = vector.load %arg5[%c0_25, %c0_26, %c0_27] : memref<3x128x64xf32, #tpu.memory_space<vmem>>, vector<1x128x64xf32>
    %27 = vector.shape_cast %26 : vector<1x128x64xf32> to vector<128x64xf32>
    %cst_28 = arith.constant dense<0.000000e+00> : vector<34x64xf32>
    %28 = tpu.matmul %25, %27, %cst_28 {dimension_numbers = #tpu.dot_dimension_numbers<[1], [0], [0], [1], [0, 0, 1, 1], [], []>} : vector<34x128xf32>, vector<128x64xf32>, vector<34x64xf32> -> vector<34x64xf32>
    %c0_29 = arith.constant 0 : index
    %c0_30 = arith.constant 0 : index
    %c0_31 = arith.constant 0 : index
    %29 = vector.load %arg6[%c0_29, %c0_30, %c0_31] : memref<3x70x34xf32, #tpu.memory_space<vmem>>, vector<1x70x34xf32>
    %30 = vector.shape_cast %29 : vector<1x70x34xf32> to vector<70x34xf32>
    %cst_32 = arith.constant dense<0.000000e+00> : vector<70x64xf32>
    %31 = tpu.matmul %30, %28, %cst_32 {dimension_numbers = #tpu.dot_dimension_numbers<[1], [0], [0], [1], [0, 0, 1, 1], [], []>} : vector<70x34xf32>, vector<34x64xf32>, vector<70x64xf32> -> vector<70x64xf32>
    %c1_33 = arith.constant 1 : index
    %c0_34 = arith.constant 0 : index
    %c0_35 = arith.constant 0 : index
    %32 = vector.load %arg5[%c1_33, %c0_34, %c0_35] : memref<3x128x64xf32, #tpu.memory_space<vmem>>, vector<1x128x64xf32>
    %33 = vector.shape_cast %32 : vector<1x128x64xf32> to vector<128x64xf32>
    %cst_36 = arith.constant dense<0.000000e+00> : vector<34x64xf32>
    %34 = tpu.matmul %25, %33, %cst_36 {dimension_numbers = #tpu.dot_dimension_numbers<[1], [0], [0], [1], [0, 0, 1, 1], [], []>} : vector<34x128xf32>, vector<128x64xf32>, vector<34x64xf32> -> vector<34x64xf32>
    %c1_37 = arith.constant 1 : index
    %c0_38 = arith.constant 0 : index
    %c0_39 = arith.constant 0 : index
    %35 = vector.load %arg6[%c1_37, %c0_38, %c0_39] : memref<3x70x34xf32, #tpu.memory_space<vmem>>, vector<1x70x34xf32>
    %36 = vector.shape_cast %35 : vector<1x70x34xf32> to vector<70x34xf32>
    %cst_40 = arith.constant dense<0.000000e+00> : vector<70x64xf32>
    %37 = tpu.matmul %36, %34, %cst_40 {dimension_numbers = #tpu.dot_dimension_numbers<[1], [0], [0], [1], [0, 0, 1, 1], [], []>} : vector<70x34xf32>, vector<34x64xf32>, vector<70x64xf32> -> vector<70x64xf32>
    %38 = arith.addf %31, %37 : vector<70x64xf32>
    %c2_41 = arith.constant 2 : index
    %c0_42 = arith.constant 0 : index
    %c0_43 = arith.constant 0 : index
    %39 = vector.load %arg5[%c2_41, %c0_42, %c0_43] : memref<3x128x64xf32, #tpu.memory_space<vmem>>, vector<1x128x64xf32>
    %40 = vector.shape_cast %39 : vector<1x128x64xf32> to vector<128x64xf32>
    %cst_44 = arith.constant dense<0.000000e+00> : vector<34x64xf32>
    %41 = tpu.matmul %25, %40, %cst_44 {dimension_numbers = #tpu.dot_dimension_numbers<[1], [0], [0], [1], [0, 0, 1, 1], [], []>} : vector<34x128xf32>, vector<128x64xf32>, vector<34x64xf32> -> vector<34x64xf32>
    %c2_45 = arith.constant 2 : index
    %c0_46 = arith.constant 0 : index
    %c0_47 = arith.constant 0 : index
    %42 = vector.load %arg6[%c2_45, %c0_46, %c0_47] : memref<3x70x34xf32, #tpu.memory_space<vmem>>, vector<1x70x34xf32>
    %43 = vector.shape_cast %42 : vector<1x70x34xf32> to vector<70x34xf32>
    %cst_48 = arith.constant dense<0.000000e+00> : vector<70x64xf32>
    %44 = tpu.matmul %43, %41, %cst_48 {dimension_numbers = #tpu.dot_dimension_numbers<[1], [0], [0], [1], [0, 0, 1, 1], [], []>} : vector<70x34xf32>, vector<34x64xf32>, vector<70x64xf32> -> vector<70x64xf32>
    %45 = arith.addf %38, %44 : vector<70x64xf32>
    %c0_49 = arith.constant 0 : index
    %c0_50 = arith.constant 0 : index
    %46 = vector.load %arg7[%c0_49, %c0_50] : memref<1x64xf32, #tpu.memory_space<vmem>>, vector<1x64xf32>
    %47 = vector.broadcast %46 : vector<1x64xf32> to vector<70x64xf32>
    %48 = arith.addf %45, %47 : vector<70x64xf32>
    %cst_51 = arith.constant 0.000000e+00 : f32
    %49 = vector.broadcast %cst_51 : f32 to vector<70x64xf32>
    %50 = arith.maximumf %48, %49 : vector<70x64xf32>
    %c0_52 = arith.constant 0 : index
    %c0_53 = arith.constant 0 : index
    %c0_54 = arith.constant 0 : index
    %51 = vector.load %arg8[%c0_52, %c0_53, %c0_54] : memref<3x64x50xf32, #tpu.memory_space<vmem>>, vector<1x64x50xf32>
    %52 = vector.shape_cast %51 : vector<1x64x50xf32> to vector<64x50xf32>
    %cst_55 = arith.constant dense<0.000000e+00> : vector<70x50xf32>
    %53 = tpu.matmul %50, %52, %cst_55 {dimension_numbers = #tpu.dot_dimension_numbers<[1], [0], [0], [1], [0, 0, 1, 1], [], []>} : vector<70x64xf32>, vector<64x50xf32>, vector<70x50xf32> -> vector<70x50xf32>
    %c0_56 = arith.constant 0 : index
    %c0_57 = arith.constant 0 : index
    %c0_58 = arith.constant 0 : index
    %54 = vector.load %arg9[%c0_56, %c0_57, %c0_58] : memref<3x142x70xf32, #tpu.memory_space<vmem>>, vector<1x142x70xf32>
    %55 = vector.shape_cast %54 : vector<1x142x70xf32> to vector<142x70xf32>
    %cst_59 = arith.constant dense<0.000000e+00> : vector<142x50xf32>
    %56 = tpu.matmul %55, %53, %cst_59 {dimension_numbers = #tpu.dot_dimension_numbers<[1], [0], [0], [1], [0, 0, 1, 1], [], []>} : vector<142x70xf32>, vector<70x50xf32>, vector<142x50xf32> -> vector<142x50xf32>
    %c1_60 = arith.constant 1 : index
    %c0_61 = arith.constant 0 : index
    %c0_62 = arith.constant 0 : index
    %57 = vector.load %arg8[%c1_60, %c0_61, %c0_62] : memref<3x64x50xf32, #tpu.memory_space<vmem>>, vector<1x64x50xf32>
    %58 = vector.shape_cast %57 : vector<1x64x50xf32> to vector<64x50xf32>
    %cst_63 = arith.constant dense<0.000000e+00> : vector<70x50xf32>
    %59 = tpu.matmul %50, %58, %cst_63 {dimension_numbers = #tpu.dot_dimension_numbers<[1], [0], [0], [1], [0, 0, 1, 1], [], []>} : vector<70x64xf32>, vector<64x50xf32>, vector<70x50xf32> -> vector<70x50xf32>
    %c1_64 = arith.constant 1 : index
    %c0_65 = arith.constant 0 : index
    %c0_66 = arith.constant 0 : index
    %60 = vector.load %arg9[%c1_64, %c0_65, %c0_66] : memref<3x142x70xf32, #tpu.memory_space<vmem>>, vector<1x142x70xf32>
    %61 = vector.shape_cast %60 : vector<1x142x70xf32> to vector<142x70xf32>
    %cst_67 = arith.constant dense<0.000000e+00> : vector<142x50xf32>
    %62 = tpu.matmul %61, %59, %cst_67 {dimension_numbers = #tpu.dot_dimension_numbers<[1], [0], [0], [1], [0, 0, 1, 1], [], []>} : vector<142x70xf32>, vector<70x50xf32>, vector<142x50xf32> -> vector<142x50xf32>
    %63 = arith.addf %56, %62 : vector<142x50xf32>
    %c2_68 = arith.constant 2 : index
    %c0_69 = arith.constant 0 : index
    %c0_70 = arith.constant 0 : index
    %64 = vector.load %arg8[%c2_68, %c0_69, %c0_70] : memref<3x64x50xf32, #tpu.memory_space<vmem>>, vector<1x64x50xf32>
    %65 = vector.shape_cast %64 : vector<1x64x50xf32> to vector<64x50xf32>
    %cst_71 = arith.constant dense<0.000000e+00> : vector<70x50xf32>
    %66 = tpu.matmul %50, %65, %cst_71 {dimension_numbers = #tpu.dot_dimension_numbers<[1], [0], [0], [1], [0, 0, 1, 1], [], []>} : vector<70x64xf32>, vector<64x50xf32>, vector<70x50xf32> -> vector<70x50xf32>
    %c2_72 = arith.constant 2 : index
    %c0_73 = arith.constant 0 : index
    %c0_74 = arith.constant 0 : index
    %67 = vector.load %arg9[%c2_72, %c0_73, %c0_74] : memref<3x142x70xf32, #tpu.memory_space<vmem>>, vector<1x142x70xf32>
    %68 = vector.shape_cast %67 : vector<1x142x70xf32> to vector<142x70xf32>
    %cst_75 = arith.constant dense<0.000000e+00> : vector<142x50xf32>
    %69 = tpu.matmul %68, %66, %cst_75 {dimension_numbers = #tpu.dot_dimension_numbers<[1], [0], [0], [1], [0, 0, 1, 1], [], []>} : vector<142x70xf32>, vector<70x50xf32>, vector<142x50xf32> -> vector<142x50xf32>
    %70 = arith.addf %63, %69 : vector<142x50xf32>
    %c0_76 = arith.constant 0 : index
    %c0_77 = arith.constant 0 : index
    %71 = vector.load %arg10[%c0_76, %c0_77] : memref<1x50xf32, #tpu.memory_space<vmem>>, vector<1x50xf32>
    %72 = vector.broadcast %71 : vector<1x50xf32> to vector<142x50xf32>
    %73 = arith.addf %70, %72 : vector<142x50xf32>
    %cst_78 = arith.constant 0.000000e+00 : f32
    %74 = vector.broadcast %cst_78 : f32 to vector<142x50xf32>
    %75 = arith.maximumf %73, %74 : vector<142x50xf32>
    %c0_79 = arith.constant 0 : index
    %c0_80 = arith.constant 0 : index
    %76 = vector.load %arg11[%c0_79, %c0_80] : memref<142x50xf32, #tpu.memory_space<vmem>>, vector<142x50xf32>
    tpu.vector_store %arg11[%c0_79, %c0_80], %75 {strides = array<i32>} : memref<142x50xf32, #tpu.memory_space<vmem>>, vector<142x50xf32>,
    return
  }
  func.func @transform_0(%arg0: i32) -> (i32, i32) {
    %c0_i32 = arith.constant 0 : i32
    %c0_i32_0 = arith.constant 0 : i32
    %c0_i32_1 = arith.constant 0 : i32
    return %c0_i32, %c0_i32_0 : i32, i32
  }
  func.func @transform_1(%arg0: i32) -> (i32, i32, i32) {
    %c0_i32 = arith.constant 0 : i32
    %c0_i32_0 = arith.constant 0 : i32
    %c0_i32_1 = arith.constant 0 : i32
    %c0_i32_2 = arith.constant 0 : i32
    return %c0_i32, %c0_i32_0, %c0_i32_1 : i32, i32, i32
  }
  func.func @transform_2(%arg0: i32) -> (i32, i32, i32) {
    %c0_i32 = arith.constant 0 : i32
    %c0_i32_0 = arith.constant 0 : i32
    %c0_i32_1 = arith.constant 0 : i32
    %c0_i32_2 = arith.constant 0 : i32
    return %c0_i32, %c0_i32_0, %c0_i32_1 : i32, i32, i32
  }
  func.func @transform_3(%arg0: i32) -> (i32, i32) {
    %c0_i32 = arith.constant 0 : i32
    %c0_i32_0 = arith.constant 0 : i32
    %c0_i32_1 = arith.constant 0 : i32
    return %c0_i32, %c0_i32_0 : i32, i32
  }
  func.func @transform_4(%arg0: i32) -> (i32, i32, i32) {
    %c0_i32 = arith.constant 0 : i32
    %c0_i32_0 = arith.constant 0 : i32
    %c0_i32_1 = arith.constant 0 : i32
    %c0_i32_2 = arith.constant 0 : i32
    return %c0_i32, %c0_i32_0, %c0_i32_1 : i32, i32, i32
  }
  func.func @transform_5(%arg0: i32) -> (i32, i32, i32) {
    %c0_i32 = arith.constant 0 : i32
    %c0_i32_0 = arith.constant 0 : i32
    %c0_i32_1 = arith.constant 0 : i32
    %c0_i32_2 = arith.constant 0 : i32
    return %c0_i32, %c0_i32_0, %c0_i32_1 : i32, i32, i32
  }
  func.func @transform_6(%arg0: i32) -> (i32, i32) {
    %c0_i32 = arith.constant 0 : i32
    %c0_i32_0 = arith.constant 0 : i32
    %c0_i32_1 = arith.constant 0 : i32
    return %c0_i32, %c0_i32_0 : i32, i32
  }
  func.func @transform_7(%arg0: i32) -> (i32, i32, i32) {
    %c0_i32 = arith.constant 0 : i32
    %c0_i32_0 = arith.constant 0 : i32
    %c0_i32_1 = arith.constant 0 : i32
    %c0_i32_2 = arith.constant 0 : i32
    return %c0_i32, %c0_i32_0, %c0_i32_1 : i32, i32, i32
  }
  func.func @transform_8(%arg0: i32) -> (i32, i32, i32) {
    %c0_i32 = arith.constant 0 : i32
    %c0_i32_0 = arith.constant 0 : i32
    %c0_i32_1 = arith.constant 0 : i32
    %c0_i32_2 = arith.constant 0 : i32
    return %c0_i32, %c0_i32_0, %c0_i32_1 : i32, i32, i32
  }
  func.func @transform_9(%arg0: i32) -> (i32, i32) {
    %c0_i32 = arith.constant 0 : i32
    %c0_i32_0 = arith.constant 0 : i32
    %c0_i32_1 = arith.constant 0 : i32
    return %c0_i32, %c0_i32_0 : i32, i32
  }
  func.func @transform_10(%arg0: i32) -> (i32, i32) {
    %c0_i32 = arith.constant 0 : i32
    %c0_i32_0 = arith.constant 0 : i32
    %c0_i32_1 = arith.constant 0 : i32
    return %c0_i32, %c0_i32_0 : i32, i32
  }
}

</mosaic_0001>

<llo_original>
// kernel: tpu_custom_call.1
$region0: #{tpu_custom_call.1}
  #allocation0 [shape = 'u32[]', space=smem, size = 0x4, offset = 0x4, fixed_abs, tag = 'smem constant byte address 0x4 - core index']
  #allocation1 [shape = 'u32[72,128]{1,0:T(1,128)}', space=vmem, size = 0x9000, scoped, tag = 'internal scratch']
  %s0 = inlined_call_operand.vmem [shape: f32[16,256], index: 0, kind: input, shape index: {}]
  %s1 = inlined_call_operand.vmem [shape: f32[3,256,128], index: 1, kind: input, shape index: {}]
  %s2 = inlined_call_operand.vmem [shape: f32[3,34,16], index: 2, kind: input, shape index: {}]
  %s3 = inlined_call_operand.vmem [shape: f32[1,128], index: 3, kind: input, shape index: {}]
  %s4 = inlined_call_operand.vmem [shape: f32[3,128,64], index: 4, kind: input, shape index: {}]
  %s5 = inlined_call_operand.vmem [shape: f32[3,70,34], index: 5, kind: input, shape index: {}]
  %s6 = inlined_call_operand.vmem [shape: f32[1,64], index: 6, kind: input, shape index: {}]
  %s7 = inlined_call_operand.vmem [shape: f32[3,64,50], index: 7, kind: input, shape index: {}]
  %s8 = inlined_call_operand.vmem [shape: f32[3,142,70], index: 8, kind: input, shape index: {}]
  %s9 = inlined_call_operand.vmem [shape: f32[1,50], index: 9, kind: input, shape index: {}]
  %s10 = inlined_call_operand.vmem [shape: f32[142,50], index: 10, kind: output, shape index: {}]
  %s11 = sld [smem:[#allocation0]]
  $region50: #{tpu_custom_call.1} parent=0
    _
  %s13 = ssub.s32 1, %s11
  %s14 = scalar_select 0, %s13, %s11
  // Predicated region
  $region2: #{tpu_custom_call.1} parent=0 // pred_check
    _
  $region3: #{tpu_custom_call.1} parent=0 // pred_check_branch
    %16 = sbr.rel (0) target = $region5
  $region4: #{tpu_custom_call.1} parent=0 // pred_region
    _
  $region5: #{tpu_custom_call.1} parent=0 // pred_fallthru
    _
  // Predicated region
  $region6: #{tpu_custom_call.1} parent=0 // pred_check
    _
  $region7: #{tpu_custom_call.1} parent=0 // pred_check_branch
    %18 = sbr.rel (0) target = $region9
  $region8: #{tpu_custom_call.1} parent=0 // pred_region
    _
  $region9: #{tpu_custom_call.1} parent=0 // pred_fallthru
    _
  // Predicated region
  $region10: #{tpu_custom_call.1} parent=0 // pred_check
    _
  $region11: #{tpu_custom_call.1} parent=0 // pred_check_branch
    %20 = sbr.rel (0) target = $region13
  $region12: #{tpu_custom_call.1} parent=0 // pred_region
    _
  $region13: #{tpu_custom_call.1} parent=0 // pred_fallthru
    _
  // Predicated region
  $region14: #{tpu_custom_call.1} parent=0 // pred_check
    _
  $region15: #{tpu_custom_call.1} parent=0 // pred_check_branch
    %22 = sbr.rel (0) target = $region17
  $region16: #{tpu_custom_call.1} parent=0 // pred_region
    _
  $region17: #{tpu_custom_call.1} parent=0 // pred_fallthru
    _
  // Predicated region
  $region18: #{tpu_custom_call.1} parent=0 // pred_check
    _
  $region19: #{tpu_custom_call.1} parent=0 // pred_check_branch
    %24 = sbr.rel (0) target = $region21
  $region20: #{tpu_custom_call.1} parent=0 // pred_region
    _
  $region21: #{tpu_custom_call.1} parent=0 // pred_fallthru
    _
  // Predicated region
  $region22: #{tpu_custom_call.1} parent=0 // pred_check
    _
  $region23: #{tpu_custom_call.1} parent=0 // pred_check_branch
    %26 = sbr.rel (0) target = $region25
  $region24: #{tpu_custom_call.1} parent=0 // pred_region
    _
  $region25: #{tpu_custom_call.1} parent=0 // pred_fallthru
    _
  // Predicated region
  $region26: #{tpu_custom_call.1} parent=0 // pred_check
    _
  $region27: #{tpu_custom_call.1} parent=0 // pred_check_branch
    %28 = sbr.rel (0) target = $region29
  $region28: #{tpu_custom_call.1} parent=0 // pred_region
    _
  $region29: #{tpu_custom_call.1} parent=0 // pred_fallthru
    _
  // Predicated region
  $region30: #{tpu_custom_call.1} parent=0 // pred_check
    _
  $region31: #{tpu_custom_call.1} parent=0 // pred_check_branch
    %30 = sbr.rel (0) target = $region33
  $region32: #{tpu_custom_call.1} parent=0 // pred_region
    _
  $region33: #{tpu_custom_call.1} parent=0 // pred_fallthru
    _
  // Predicated region
  $region34: #{tpu_custom_call.1} parent=0 // pred_check
    _
  $region35: #{tpu_custom_call.1} parent=0 // pred_check_branch
    %32 = sbr.rel (0) target = $region37
  $region36: #{tpu_custom_call.1} parent=0 // pred_region
    _
  $region37: #{tpu_custom_call.1} parent=0 // pred_fallthru
    _
  // Predicated region
  $region38: #{tpu_custom_call.1} parent=0 // pred_check
    _
  $region39: #{tpu_custom_call.1} parent=0 // pred_check_branch
    %34 = sbr.rel (0) target = $region41
  $region40: #{tpu_custom_call.1} parent=0 // pred_region
    _
  $region41: #{tpu_custom_call.1} parent=0 // pred_fallthru
    _
  %v35 = vld [vmem:[%s0] sm:$0xff]
  %v36 = vld [vmem:[%s0 + $0x8] sm:$0xff]
  %v37 = vld [vmem:[%s0 + $0x10] sm:$0xff]
  %v38 = vld [vmem:[%s0 + $0x18] sm:$0xff]
  %v39 = vld [vmem:[%s1] sm:$0xff]
  %v40 = vld [vmem:[%s1 + $0x8] sm:$0xff]
  %v41 = vld [vmem:[%s1 + $0x10] sm:$0xff]
  %v42 = vld [vmem:[%s1 + $0x18] sm:$0xff]
  %v43 = vld [vmem:[%s1 + $0x20] sm:$0xff]
  %v44 = vld [vmem:[%s1 + $0x28] sm:$0xff]
  %v45 = vld [vmem:[%s1 + $0x30] sm:$0xff]
  %v46 = vld [vmem:[%s1 + $0x38] sm:$0xff]
  %v47 = vld [vmem:[%s1 + $0x40] sm:$0xff]
  %v48 = vld [vmem:[%s1 + $0x48] sm:$0xff]
  %v49 = vld [vmem:[%s1 + $0x50] sm:$0xff]
  %v50 = vld [vmem:[%s1 + $0x58] sm:$0xff]
  %v51 = vld [vmem:[%s1 + $0x60] sm:$0xff]
  %v52 = vld [vmem:[%s1 + $0x68] sm:$0xff]
  %v53 = vld [vmem:[%s1 + $0x70] sm:$0xff]
  %v54 = vld [vmem:[%s1 + $0x78] sm:$0xff]
  %v55 = vld [vmem:[%s1 + $0x80] sm:$0xff]
  %v56 = vld [vmem:[%s1 + $0x88] sm:$0xff]
  %v57 = vld [vmem:[%s1 + $0x90] sm:$0xff]
  %v58 = vld [vmem:[%s1 + $0x98] sm:$0xff]
  %v59 = vld [vmem:[%s1 + $0xa0] sm:$0xff]
  %v60 = vld [vmem:[%s1 + $0xa8] sm:$0xff]
  %v61 = vld [vmem:[%s1 + $0xb0] sm:$0xff]
  %v62 = vld [vmem:[%s1 + $0xb8] sm:$0xff]
  %v63 = vld [vmem:[%s1 + $0xc0] sm:$0xff]
  %v64 = vld [vmem:[%s1 + $0xc8] sm:$0xff]
  %v65 = vld [vmem:[%s1 + $0xd0] sm:$0xff]
  %v66 = vld [vmem:[%s1 + $0xd8] sm:$0xff]
  %v67 = vld [vmem:[%s1 + $0xe0] sm:$0xff]
  %v68 = vld [vmem:[%s1 + $0xe8] sm:$0xff]
  %v69 = vld [vmem:[%s1 + $0xf0] sm:$0xff]
  %v70 = vld [vmem:[%s1 + $0xf8] sm:$0xff]
  %71 = vmatpush.msra.mxu0 %v54
  %72 = vmatpush.msra.mxu0 %v53
  %73 = vmatpush.msra.mxu0 %v52
  %74 = vmatpush.msra.mxu0 %v51
  %75 = vmatpush.msra.mxu0 %v50
  %76 = vmatpush.msra.mxu0 %v49
  %77 = vmatpush.msra.mxu0 %v48
  %78 = vmatpush.msra.mxu0 %v47
  %79 = vmatpush.msra.mxu0 %v46
  %80 = vmatpush.msra.mxu0 %v45
  %81 = vmatpush.msra.mxu0 %v44
  %82 = vmatpush.msra.mxu0 %v43
  %83 = vmatpush.msra.mxu0 %v42
  %84 = vmatpush.msra.mxu0 %v41
  %85 = vmatpush.msra.mxu0 %v40
  %86 = vmatpush.msra.mxu0 %v39
  %87 = vmatmul.f32.gmra.mxu0 %v35
  %v88 = vpop.f32.mrf.mxu0
  %v89 = vadd.f32 0.0, %v88
  %90 = vmatmul.f32.gmra.mxu0 %v37
  %v91 = vpop.f32.mrf.mxu0
  %v92 = vadd.f32 0.0, %v91
  %93 = vdwg.mxu0
  %94 = vmatpush.msra.mxu0 %v70
  %95 = vmatpush.msra.mxu0 %v69
  %96 = vmatpush.msra.mxu0 %v68
  %97 = vmatpush.msra.mxu0 %v67
  %98 = vmatpush.msra.mxu0 %v66
  %99 = vmatpush.msra.mxu0 %v65
  %100 = vmatpush.msra.mxu0 %v64
  %101 = vmatpush.msra.mxu0 %v63
  %102 = vmatpush.msra.mxu0 %v62
  %103 = vmatpush.msra.mxu0 %v61
  %104 = vmatpush.msra.mxu0 %v60
  %105 = vmatpush.msra.mxu0 %v59
  %106 = vmatpush.msra.mxu0 %v58
  %107 = vmatpush.msra.mxu0 %v57
  %108 = vmatpush.msra.mxu0 %v56
  %109 = vmatpush.msra.mxu0 %v55
  %110 = vmatmul.f32.gmra.mxu0 %v36
  %v111 = vpop.f32.mrf.mxu0
  %v112 = vadd.f32 %v89, %v111
  %113 = vmatmul.f32.gmra.mxu0 %v38
  %v114 = vpop.f32.mrf.mxu0
  %v115 = vadd.f32 %v92, %v114
  %116 = vdwg.mxu0
  %v117 = vld [vmem:[%s2] sm:$0xff]
  %v118 = vld [vmem:[%s2 + $0x8] sm:$0xff]
  %v119 = vld [vmem:[%s2 + $0x10] sm:$0xff]
  %v120 = vld [vmem:[%s2 + $0x18] sm:$0xff]
  %v121 = vld [vmem:[%s2 + $0x20] sm:$0x3]
  %s122 = scalar_lea.vmem %s1, 256
  %v123 = vld [vmem:[%s122] sm:$0xff]
  %v124 = vld [vmem:[%s122 + $0x8] sm:$0xff]
  %v125 = vld [vmem:[%s122 + $0x10] sm:$0xff]
  %v126 = vld [vmem:[%s122 + $0x18] sm:$0xff]
  %v127 = vld [vmem:[%s122 + $0x20] sm:$0xff]
  %v128 = vld [vmem:[%s122 + $0x28] sm:$0xff]
  %v129 = vld [vmem:[%s122 + $0x30] sm:$0xff]
  %v130 = vld [vmem:[%s122 + $0x38] sm:$0xff]
  %v131 = vld [vmem:[%s122 + $0x40] sm:$0xff]
  %v132 = vld [vmem:[%s122 + $0x48] sm:$0xff]
  %v133 = vld [vmem:[%s122 + $0x50] sm:$0xff]
  %v134 = vld [vmem:[%s122 + $0x58] sm:$0xff]
  %v135 = vld [vmem:[%s122 + $0x60] sm:$0xff]
  %v136 = vld [vmem:[%s122 + $0x68] sm:$0xff]
  %v137 = vld [vmem:[%s122 + $0x70] sm:$0xff]
  %v138 = vld [vmem:[%s122 + $0x78] sm:$0xff]
  %v139 = vld [vmem:[%s122 + $0x80] sm:$0xff]
  %v140 = vld [vmem:[%s122 + $0x88] sm:$0xff]
  %v141 = vld [vmem:[%s122 + $0x90] sm:$0xff]
  %v142 = vld [vmem:[%s122 + $0x98] sm:$0xff]
  %v143 = vld [vmem:[%s122 + $0xa0] sm:$0xff]
  %v144 = vld [vmem:[%s122 + $0xa8] sm:$0xff]
  %v145 = vld [vmem:[%s122 + $0xb0] sm:$0xff]
  %v146 = vld [vmem:[%s122 + $0xb8] sm:$0xff]
  %v147 = vld [vmem:[%s122 + $0xc0] sm:$0xff]
  %v148 = vld [vmem:[%s122 + $0xc8] sm:$0xff]
  %v149 = vld [vmem:[%s122 + $0xd0] sm:$0xff]
  %v150 = vld [vmem:[%s122 + $0xd8] sm:$0xff]
  %v151 = vld [vmem:[%s122 + $0xe0] sm:$0xff]
  %v152 = vld [vmem:[%s122 + $0xe8] sm:$0xff]
  %v153 = vld [vmem:[%s122 + $0xf0] sm:$0xff]
  %v154 = vld [vmem:[%s122 + $0xf8] sm:$0xff]
  %155 = vmatpush.msra.mxu0 %v138
  %156 = vmatpush.msra.mxu0 %v137
  %157 = vmatpush.msra.mxu0 %v136
  %158 = vmatpush.msra.mxu0 %v135
  %159 = vmatpush.msra.mxu0 %v134
  %160 = vmatpush.msra.mxu0 %v133
  %161 = vmatpush.msra.mxu0 %v132
  %162 = vmatpush.msra.mxu0 %v131
  %163 = vmatpush.msra.mxu0 %v130
  %164 = vmatpush.msra.mxu0 %v129
  %165 = vmatpush.msra.mxu0 %v128
  %166 = vmatpush.msra.mxu0 %v127
  %167 = vmatpush.msra.mxu0 %v126
  %168 = vmatpush.msra.mxu0 %v125
  %169 = vmatpush.msra.mxu0 %v124
  %170 = vmatpush.msra.mxu0 %v123
  %171 = vmatmul.f32.gmra.mxu0 %v35
  %v172 = vpop.f32.mrf.mxu0
  %v173 = vadd.f32 0.0, %v172
  %174 = vmatmul.f32.gmra.mxu0 %v37
  %v175 = vpop.f32.mrf.mxu0
  %v176 = vadd.f32 0.0, %v175
  %177 = vdwg.mxu0
  %178 = vmatpush.msra.mxu0 %v154
  %179 = vmatpush.msra.mxu0 %v153
  %180 = vmatpush.msra.mxu0 %v152
  %181 = vmatpush.msra.mxu0 %v151
  %182 = vmatpush.msra.mxu0 %v150
  %183 = vmatpush.msra.mxu0 %v149
  %184 = vmatpush.msra.mxu0 %v148
  %185 = vmatpush.msra.mxu0 %v147
  %186 = vmatpush.msra.mxu0 %v146
  %187 = vmatpush.msra.mxu0 %v145
  %188 = vmatpush.msra.mxu0 %v144
  %189 = vmatpush.msra.mxu0 %v143
  %190 = vmatpush.msra.mxu0 %v142
  %191 = vmatpush.msra.mxu0 %v141
  %192 = vmatpush.msra.mxu0 %v140
  %193 = vmatpush.msra.mxu0 %v139
  %194 = vmatmul.f32.gmra.mxu0 %v36
  %v195 = vpop.f32.mrf.mxu0
  %v196 = vadd.f32 %v173, %v195
  %197 = vmatmul.f32.gmra.mxu0 %v38
  %v198 = vpop.f32.mrf.mxu0
  %v199 = vadd.f32 %v176, %v198
  %200 = vdwg.mxu0
  %s201 = scalar_lea.vmem %s2, 40
  %v202 = vld [vmem:[%s201] sm:$0xff]
  %v203 = vld [vmem:[%s201 + $0x8] sm:$0xff]
  %v204 = vld [vmem:[%s201 + $0x10] sm:$0xff]
  %v205 = vld [vmem:[%s201 + $0x18] sm:$0xff]
  %v206 = vld [vmem:[%s201 + $0x20] sm:$0x3]
  %vm207 = vcmask 130048
  %v209 = vsel %vm207, %v202, 0
  %v212 = vsel %vm207, %v203, 0
  %v215 = vsel %vm207, %v204, 0
  %v218 = vsel %vm207, %v205, 0
  %v221 = vsel %vm207, %v206, 0
  %223 = vmatpush.msra.mxu0 0.0
  %224 = vmatpush.msra.mxu0 0.0
  %225 = vmatpush.msra.mxu0 0.0
  %226 = vmatpush.msra.mxu0 0.0
  %227 = vmatpush.msra.mxu0 0.0
  %228 = vmatpush.msra.mxu0 0.0
  %229 = vmatpush.msra.mxu0 0.0
  %230 = vmatpush.msra.mxu0 0.0
  %231 = vmatpush.msra.mxu0 0.0
  %232 = vmatpush.msra.mxu0 0.0
  %233 = vmatpush.msra.mxu0 0.0
  %234 = vmatpush.msra.mxu0 0.0
  %235 = vmatpush.msra.mxu0 0.0
  %236 = vmatpush.msra.mxu0 0.0
  %237 = vmatpush.msra.mxu0 %v199
  %238 = vmatpush.msra.mxu0 %v196
  %239 = vmatmul.f32.gmra.mxu0 %v209
  %v240 = vpop.f32.mrf.mxu0
  %v241 = vadd.f32 0.0, %v240
  %242 = vmatmul.f32.gmra.mxu0 %v212
  %v243 = vpop.f32.mrf.mxu0
  %v244 = vadd.f32 0.0, %v243
  %245 = vmatmul.f32.gmra.mxu0 %v215
  %v246 = vpop.f32.mrf.mxu0
  %v247 = vadd.f32 0.0, %v246
  %248 = vmatmul.f32.gmra.mxu0 %v218
  %v249 = vpop.f32.mrf.mxu0
  %v250 = vadd.f32 0.0, %v249
  %251 = vmatmul.f32.gmra.mxu0 %v221
  %v252 = vpop.f32.mrf.mxu0
  %v253 = vadd.f32 0.0, %v252
  %254 = vdwg.mxu0
  %v256 = vsel %vm207, %v117, 0
  %v259 = vsel %vm207, %v118, 0
  %v262 = vsel %vm207, %v119, 0
  %v265 = vsel %vm207, %v120, 0
  %v268 = vsel %vm207, %v121, 0
  %270 = vmatpush.msra.mxu0 0.0
  %271 = vmatpush.msra.mxu0 0.0
  %272 = vmatpush.msra.mxu0 0.0
  %273 = vmatpush.msra.mxu0 0.0
  %274 = vmatpush.msra.mxu0 0.0
  %275 = vmatpush.msra.mxu0 0.0
  %276 = vmatpush.msra.mxu0 0.0
  %277 = vmatpush.msra.mxu0 0.0
  %278 = vmatpush.msra.mxu0 0.0
  %279 = vmatpush.msra.mxu0 0.0
  %280 = vmatpush.msra.mxu0 0.0
  %281 = vmatpush.msra.mxu0 0.0
  %282 = vmatpush.msra.mxu0 0.0
  %283 = vmatpush.msra.mxu0 0.0
  %284 = vmatpush.msra.mxu0 %v115
  %285 = vmatpush.msra.mxu0 %v112
  %286 = vmatmul.f32.gmra.mxu0 %v256
  %v287 = vpop.f32.mrf.mxu0
  %v288 = vadd.f32 %v241, %v287
  %289 = vmatmul.f32.gmra.mxu0 %v259
  %v290 = vpop.f32.mrf.mxu0
  %v291 = vadd.f32 %v244, %v290
  %292 = vmatmul.f32.gmra.mxu0 %v262
  %v293 = vpop.f32.mrf.mxu0
  %v294 = vadd.f32 %v247, %v293
  %295 = vmatmul.f32.gmra.mxu0 %v265
  %v296 = vpop.f32.mrf.mxu0
  %v297 = vadd.f32 %v250, %v296
  %298 = vmatmul.f32.gmra.mxu0 %v268
  %v299 = vpop.f32.mrf.mxu0
  %v300 = vadd.f32 %v253, %v299
  %301 = vdwg.mxu0
  %s302 = scalar_lea.vmem %s1, 512
  %v303 = vld [vmem:[%s302] sm:$0xff]
  %v304 = vld [vmem:[%s302 + $0x8] sm:$0xff]
  %v305 = vld [vmem:[%s302 + $0x10] sm:$0xff]
  %v306 = vld [vmem:[%s302 + $0x18] sm:$0xff]
  %v307 = vld [vmem:[%s302 + $0x20] sm:$0xff]
  %v308 = vld [vmem:[%s302 + $0x28] sm:$0xff]
  %v309 = vld [vmem:[%s302 + $0x30] sm:$0xff]
  %v310 = vld [vmem:[%s302 + $0x38] sm:$0xff]
  %v311 = vld [vmem:[%s302 + $0x40] sm:$0xff]
  %v312 = vld [vmem:[%s302 + $0x48] sm:$0xff]
  %v313 = vld [vmem:[%s302 + $0x50] sm:$0xff]
  %v314 = vld [vmem:[%s302 + $0x58] sm:$0xff]
  %v315 = vld [vmem:[%s302 + $0x60] sm:$0xff]
  %v316 = vld [vmem:[%s302 + $0x68] sm:$0xff]
  %v317 = vld [vmem:[%s302 + $0x70] sm:$0xff]
  %v318 = vld [vmem:[%s302 + $0x78] sm:$0xff]
  %v319 = vld [vmem:[%s302 + $0x80] sm:$0xff]
  %v320 = vld [vmem:[%s302 + $0x88] sm:$0xff]
  %v321 = vld [vmem:[%s302 + $0x90] sm:$0xff]
  %v322 = vld [vmem:[%s302 + $0x98] sm:$0xff]
  %v323 = vld [vmem:[%s302 + $0xa0] sm:$0xff]
  %v324 = vld [vmem:[%s302 + $0xa8] sm:$0xff]
  %v325 = vld [vmem:[%s302 + $0xb0] sm:$0xff]
  %v326 = vld [vmem:[%s302 + $0xb8] sm:$0xff]
  %v327 = vld [vmem:[%s302 + $0xc0] sm:$0xff]
  %v328 = vld [vmem:[%s302 + $0xc8] sm:$0xff]
  %v329 = vld [vmem:[%s302 + $0xd0] sm:$0xff]
  %v330 = vld [vmem:[%s302 + $0xd8] sm:$0xff]
  %v331 = vld [vmem:[%s302 + $0xe0] sm:$0xff]
  %v332 = vld [vmem:[%s302 + $0xe8] sm:$0xff]
  %v333 = vld [vmem:[%s302 + $0xf0] sm:$0xff]
  %v334 = vld [vmem:[%s302 + $0xf8] sm:$0xff]
  %335 = vmatpush.msra.mxu0 %v318
  %336 = vmatpush.msra.mxu0 %v317
  %337 = vmatpush.msra.mxu0 %v316
  %338 = vmatpush.msra.mxu0 %v315
  %339 = vmatpush.msra.mxu0 %v314
  %340 = vmatpush.msra.mxu0 %v313
  %341 = vmatpush.msra.mxu0 %v312
  %342 = vmatpush.msra.mxu0 %v311
  %343 = vmatpush.msra.mxu0 %v310
  %344 = vmatpush.msra.mxu0 %v309
  %345 = vmatpush.msra.mxu0 %v308
  %346 = vmatpush.msra.mxu0 %v307
  %347 = vmatpush.msra.mxu0 %v306
  %348 = vmatpush.msra.mxu0 %v305
  %349 = vmatpush.msra.mxu0 %v304
  %350 = vmatpush.msra.mxu0 %v303
  %351 = vmatmul.f32.gmra.mxu0 %v35
  %v352 = vpop.f32.mrf.mxu0
  %v353 = vadd.f32 0.0, %v352
  %354 = vmatmul.f32.gmra.mxu0 %v37
  %v355 = vpop.f32.mrf.mxu0
  %v356 = vadd.f32 0.0, %v355
  %357 = vdwg.mxu0
  %358 = vmatpush.msra.mxu0 %v334
  %359 = vmatpush.msra.mxu0 %v333
  %360 = vmatpush.msra.mxu0 %v332
  %361 = vmatpush.msra.mxu0 %v331
  %362 = vmatpush.msra.mxu0 %v330
  %363 = vmatpush.msra.mxu0 %v329
  %364 = vmatpush.msra.mxu0 %v328
  %365 = vmatpush.msra.mxu0 %v327
  %366 = vmatpush.msra.mxu0 %v326
  %367 = vmatpush.msra.mxu0 %v325
  %368 = vmatpush.msra.mxu0 %v324
  %369 = vmatpush.msra.mxu0 %v323
  %370 = vmatpush.msra.mxu0 %v322
  %371 = vmatpush.msra.mxu0 %v321
  %372 = vmatpush.msra.mxu0 %v320
  %373 = vmatpush.msra.mxu0 %v319
  %374 = vmatmul.f32.gmra.mxu0 %v36
  %v375 = vpop.f32.mrf.mxu0
  %v376 = vadd.f32 %v353, %v375
  %377 = vmatmul.f32.gmra.mxu0 %v38
  %v378 = vpop.f32.mrf.mxu0
  %v379 = vadd.f32 %v356, %v378
  %380 = vdwg.mxu0
  %s381 = scalar_lea.vmem %s2, 80
  %v382 = vld [vmem:[%s381] sm:$0xff]
  %v383 = vld [vmem:[%s381 + $0x8] sm:$0xff]
  %v384 = vld [vmem:[%s381 + $0x10] sm:$0xff]
  %v385 = vld [vmem:[%s381 + $0x18] sm:$0xff]
  %v386 = vld [vmem:[%s381 + $0x20] sm:$0x3]
  %v388 = vsel %vm207, %v382, 0
  %v391 = vsel %vm207, %v383, 0
  %v394 = vsel %vm207, %v384, 0
  %v397 = vsel %vm207, %v385, 0
  %v400 = vsel %vm207, %v386, 0
  %402 = vmatpush.msra.mxu0 0.0
  %403 = vmatpush.msra.mxu0 0.0
  %404 = vmatpush.msra.mxu0 0.0
  %405 = vmatpush.msra.mxu0 0.0
  %406 = vmatpush.msra.mxu0 0.0
  %407 = vmatpush.msra.mxu0 0.0
  %408 = vmatpush.msra.mxu0 0.0
  %409 = vmatpush.msra.mxu0 0.0
  %410 = vmatpush.msra.mxu0 0.0
  %411 = vmatpush.msra.mxu0 0.0
  %412 = vmatpush.msra.mxu0 0.0
  %413 = vmatpush.msra.mxu0 0.0
  %414 = vmatpush.msra.mxu0 0.0
  %415 = vmatpush.msra.mxu0 0.0
  %416 = vmatpush.msra.mxu0 %v379
  %417 = vmatpush.msra.mxu0 %v376
  %418 = vmatmul.f32.gmra.mxu0 %v388
  %v419 = vpop.f32.mrf.mxu0
  %v420 = vadd.f32 0.0, %v419
  %421 = vmatmul.f32.gmra.mxu0 %v391
  %v422 = vpop.f32.mrf.mxu0
  %v423 = vadd.f32 0.0, %v422
  %424 = vmatmul.f32.gmra.mxu0 %v394
  %v425 = vpop.f32.mrf.mxu0
  %v426 = vadd.f32 0.0, %v425
  %427 = vmatmul.f32.gmra.mxu0 %v397
  %v428 = vpop.f32.mrf.mxu0
  %v429 = vadd.f32 0.0, %v428
  %430 = vmatmul.f32.gmra.mxu0 %v400
  %v431 = vpop.f32.mrf.mxu0
  %v432 = vadd.f32 0.0, %v431
  %433 = vdwg.mxu0
  %v434 = vadd.f32 %v288, %v420
  %v435 = vadd.f32 %v291, %v423
  %v436 = vadd.f32 %v294, %v426
  %v437 = vadd.f32 %v297, %v429
  %v438 = vadd.f32 %v300, %v432
  %v439 = vld [vmem:[%s3] sm:$0x1]
  %v441 = vperm.slane %v439, 0
  %v443 = vadd.f32 %v434, %v441
  %v444 = vadd.f32 %v435, %v441
  %v445 = vadd.f32 %v436, %v441
  %v446 = vadd.f32 %v437, %v441
  %v447 = vadd.f32 %v438, %v441
  %v448 = vmax.f32 %v443, 0.0
  %v449 = vmax.f32 %v444, 0.0
  %v450 = vmax.f32 %v445, 0.0
  %v451 = vmax.f32 %v446, 0.0
  %v452 = vmax.f32 %v447, 0.0
  %v453 = vld [vmem:[%s4] sm:$0xff]
  %v454 = vld [vmem:[%s4 + $0x8] sm:$0xff]
  %v455 = vld [vmem:[%s4 + $0x10] sm:$0xff]
  %v456 = vld [vmem:[%s4 + $0x18] sm:$0xff]
  %v457 = vld [vmem:[%s4 + $0x20] sm:$0xff]
  %v458 = vld [vmem:[%s4 + $0x28] sm:$0xff]
  %v459 = vld [vmem:[%s4 + $0x30] sm:$0xff]
  %v460 = vld [vmem:[%s4 + $0x38] sm:$0xff]
  %v461 = vld [vmem:[%s4 + $0x40] sm:$0xff]
  %v462 = vld [vmem:[%s4 + $0x48] sm:$0xff]
  %v463 = vld [vmem:[%s4 + $0x50] sm:$0xff]
  %v464 = vld [vmem:[%s4 + $0x58] sm:$0xff]
  %v465 = vld [vmem:[%s4 + $0x60] sm:$0xff]
  %v466 = vld [vmem:[%s4 + $0x68] sm:$0xff]
  %v467 = vld [vmem:[%s4 + $0x70] sm:$0xff]
  %v468 = vld [vmem:[%s4 + $0x78] sm:$0xff]
  %469 = vmatpush.msra.mxu0 %v468
  %470 = vmatpush.msra.mxu0 %v467
  %471 = vmatpush.msra.mxu0 %v466
  %472 = vmatpush.msra.mxu0 %v465
  %473 = vmatpush.msra.mxu0 %v464
  %474 = vmatpush.msra.mxu0 %v463
  %475 = vmatpush.msra.mxu0 %v462
  %476 = vmatpush.msra.mxu0 %v461
  %477 = vmatpush.msra.mxu0 %v460
  %478 = vmatpush.msra.mxu0 %v459
  %479 = vmatpush.msra.mxu0 %v458
  %480 = vmatpush.msra.mxu0 %v457
  %481 = vmatpush.msra.mxu0 %v456
  %482 = vmatpush.msra.mxu0 %v455
  %483 = vmatpush.msra.mxu0 %v454
  %484 = vmatpush.msra.mxu0 %v453
  %485 = vmatmul.f32.gmra.mxu0 %v448
  %v486 = vpop.f32.mrf.mxu0
  %v487 = vadd.f32 0.0, %v486
  %488 = vmatmul.f32.gmra.mxu0 %v449
  %v489 = vpop.f32.mrf.mxu0
  %v490 = vadd.f32 0.0, %v489
  %491 = vmatmul.f32.gmra.mxu0 %v450
  %v492 = vpop.f32.mrf.mxu0
  %v493 = vadd.f32 0.0, %v492
  %494 = vmatmul.f32.gmra.mxu0 %v451
  %v495 = vpop.f32.mrf.mxu0
  %v496 = vadd.f32 0.0, %v495
  %497 = vmatmul.f32.gmra.mxu0 %v452
  %v498 = vpop.f32.mrf.mxu0
  %v499 = vadd.f32 0.0, %v498
  %500 = vdwg.mxu0
  %v501 = vld [vmem:[%s5] sm:$0xff]
  %v502 = vld [vmem:[%s5 + $0x8] sm:$0xff]
  %v503 = vld [vmem:[%s5 + $0x10] sm:$0xff]
  %v504 = vld [vmem:[%s5 + $0x18] sm:$0xff]
  %v505 = vld [vmem:[%s5 + $0x20] sm:$0xff]
  %v506 = vld [vmem:[%s5 + $0x28] sm:$0xff]
  %v507 = vld [vmem:[%s5 + $0x30] sm:$0xff]
  %v508 = vld [vmem:[%s5 + $0x38] sm:$0xff]
  %v509 = vld [vmem:[%s5 + $0x40] sm:$0x3f]
  %s510 = scalar_lea.vmem %s4, 128
  %v511 = vld [vmem:[%s510] sm:$0xff]
  %v512 = vld [vmem:[%s510 + $0x8] sm:$0xff]
  %v513 = vld [vmem:[%s510 + $0x10] sm:$0xff]
  %v514 = vld [vmem:[%s510 + $0x18] sm:$0xff]
  %v515 = vld [vmem:[%s510 + $0x20] sm:$0xff]
  %v516 = vld [vmem:[%s510 + $0x28] sm:$0xff]
  %v517 = vld [vmem:[%s510 + $0x30] sm:$0xff]
  %v518 = vld [vmem:[%s510 + $0x38] sm:$0xff]
  %v519 = vld [vmem:[%s510 + $0x40] sm:$0xff]
  %v520 = vld [vmem:[%s510 + $0x48] sm:$0xff]
  %v521 = vld [vmem:[%s510 + $0x50] sm:$0xff]
  %v522 = vld [vmem:[%s510 + $0x58] sm:$0xff]
  %v523 = vld [vmem:[%s510 + $0x60] sm:$0xff]
  %v524 = vld [vmem:[%s510 + $0x68] sm:$0xff]
  %v525 = vld [vmem:[%s510 + $0x70] sm:$0xff]
  %v526 = vld [vmem:[%s510 + $0x78] sm:$0xff]
  %527 = vmatpush.msra.mxu0 %v526
  %528 = vmatpush.msra.mxu0 %v525
  %529 = vmatpush.msra.mxu0 %v524
  %530 = vmatpush.msra.mxu0 %v523
  %531 = vmatpush.msra.mxu0 %v522
  %532 = vmatpush.msra.mxu0 %v521
  %533 = vmatpush.msra.mxu0 %v520
  %534 = vmatpush.msra.mxu0 %v519
  %535 = vmatpush.msra.mxu0 %v518
  %536 = vmatpush.msra.mxu0 %v517
  %537 = vmatpush.msra.mxu0 %v516
  %538 = vmatpush.msra.mxu0 %v515
  %539 = vmatpush.msra.mxu0 %v514
  %540 = vmatpush.msra.mxu0 %v513
  %541 = vmatpush.msra.mxu0 %v512
  %542 = vmatpush.msra.mxu0 %v511
  %543 = vmatmul.f32.gmra.mxu0 %v448
  %v544 = vpop.f32.mrf.mxu0
  %v545 = vadd.f32 0.0, %v544
  %546 = vmatmul.f32.gmra.mxu0 %v449
  %v547 = vpop.f32.mrf.mxu0
  %v548 = vadd.f32 0.0, %v547
  %549 = vmatmul.f32.gmra.mxu0 %v450
  %v550 = vpop.f32.mrf.mxu0
  %v551 = vadd.f32 0.0, %v550
  %552 = vmatmul.f32.gmra.mxu0 %v451
  %v553 = vpop.f32.mrf.mxu0
  %v554 = vadd.f32 0.0, %v553
  %555 = vmatmul.f32.gmra.mxu0 %v452
  %v556 = vpop.f32.mrf.mxu0
  %v557 = vadd.f32 0.0, %v556
  %558 = vdwg.mxu0
  %s559 = scalar_lea.vmem %s5, 72
  %v560 = vld [vmem:[%s559] sm:$0xff]
  %v561 = vld [vmem:[%s559 + $0x8] sm:$0xff]
  %v562 = vld [vmem:[%s559 + $0x10] sm:$0xff]
  %v563 = vld [vmem:[%s559 + $0x18] sm:$0xff]
  %v564 = vld [vmem:[%s559 + $0x20] sm:$0xff]
  %v565 = vld [vmem:[%s559 + $0x28] sm:$0xff]
  %v566 = vld [vmem:[%s559 + $0x30] sm:$0xff]
  %v567 = vld [vmem:[%s559 + $0x38] sm:$0xff]
  %v568 = vld [vmem:[%s559 + $0x40] sm:$0x3f]
  %vm569 = vcmask 277504
  %v571 = vsel %vm569, %v560, 0
  %v574 = vsel %vm569, %v561, 0
  %v577 = vsel %vm569, %v562, 0
  %v580 = vsel %vm569, %v563, 0
  %v583 = vsel %vm569, %v564, 0
  %v586 = vsel %vm569, %v565, 0
  %v589 = vsel %vm569, %v566, 0
  %v592 = vsel %vm569, %v567, 0
  %v595 = vsel %vm569, %v568, 0
  %vm597 = vcmask 1041408
  %v599 = vsel %vm597, %v557, 0
  %601 = vmatpush.msra.mxu0 0.0
  %602 = vmatpush.msra.mxu0 0.0
  %603 = vmatpush.msra.mxu0 0.0
  %604 = vmatpush.msra.mxu0 0.0
  %605 = vmatpush.msra.mxu0 0.0
  %606 = vmatpush.msra.mxu0 0.0
  %607 = vmatpush.msra.mxu0 0.0
  %608 = vmatpush.msra.mxu0 0.0
  %609 = vmatpush.msra.mxu0 0.0
  %610 = vmatpush.msra.mxu0 0.0
  %611 = vmatpush.msra.mxu0 0.0
  %612 = vmatpush.msra.mxu0 %v599
  %613 = vmatpush.msra.mxu0 %v554
  %614 = vmatpush.msra.mxu0 %v551
  %615 = vmatpush.msra.mxu0 %v548
  %616 = vmatpush.msra.mxu0 %v545
  %617 = vmatmul.f32.gmra.mxu0 %v571
  %v618 = vpop.f32.mrf.mxu0
  %v619 = vadd.f32 0.0, %v618
  %620 = vmatmul.f32.gmra.mxu0 %v574
  %v621 = vpop.f32.mrf.mxu0
  %v622 = vadd.f32 0.0, %v621
  %623 = vmatmul.f32.gmra.mxu0 %v577
  %v624 = vpop.f32.mrf.mxu0
  %v625 = vadd.f32 0.0, %v624
  %626 = vmatmul.f32.gmra.mxu0 %v580
  %v627 = vpop.f32.mrf.mxu0
  %v628 = vadd.f32 0.0, %v627
  %629 = vmatmul.f32.gmra.mxu0 %v583
  %v630 = vpop.f32.mrf.mxu0
  %v631 = vadd.f32 0.0, %v630
  %632 = vmatmul.f32.gmra.mxu0 %v586
  %v633 = vpop.f32.mrf.mxu0
  %v634 = vadd.f32 0.0, %v633
  %635 = vmatmul.f32.gmra.mxu0 %v589
  %v636 = vpop.f32.mrf.mxu0
  %v637 = vadd.f32 0.0, %v636
  %638 = vmatmul.f32.gmra.mxu0 %v592
  %v639 = vpop.f32.mrf.mxu0
  %v640 = vadd.f32 0.0, %v639
  %641 = vmatmul.f32.gmra.mxu0 %v595
  %v642 = vpop.f32.mrf.mxu0
  %v643 = vadd.f32 0.0, %v642
  %644 = vdwg.mxu0
  %v646 = vsel %vm569, %v501, 0
  %v649 = vsel %vm569, %v502, 0
  %v652 = vsel %vm569, %v503, 0
  %v655 = vsel %vm569, %v504, 0
  %v658 = vsel %vm569, %v505, 0
  %v661 = vsel %vm569, %v506, 0
  %v664 = vsel %vm569, %v507, 0
  %v667 = vsel %vm569, %v508, 0
  %v670 = vsel %vm569, %v509, 0
  %v673 = vsel %vm597, %v499, 0
  %675 = vmatpush.msra.mxu0 0.0
  %676 = vmatpush.msra.mxu0 0.0
  %677 = vmatpush.msra.mxu0 0.0
  %678 = vmatpush.msra.mxu0 0.0
  %679 = vmatpush.msra.mxu0 0.0
  %680 = vmatpush.msra.mxu0 0.0
  %681 = vmatpush.msra.mxu0 0.0
  %682 = vmatpush.msra.mxu0 0.0
  %683 = vmatpush.msra.mxu0 0.0
  %684 = vmatpush.msra.mxu0 0.0
  %685 = vmatpush.msra.mxu0 0.0
  %686 = vmatpush.msra.mxu0 %v673
  %687 = vmatpush.msra.mxu0 %v496
  %688 = vmatpush.msra.mxu0 %v493
  %689 = vmatpush.msra.mxu0 %v490
  %690 = vmatpush.msra.mxu0 %v487
  %691 = vmatmul.f32.gmra.mxu0 %v646
  %v692 = vpop.f32.mrf.mxu0
  %v693 = vadd.f32 %v619, %v692
  %694 = vmatmul.f32.gmra.mxu0 %v649
  %v695 = vpop.f32.mrf.mxu0
  %v696 = vadd.f32 %v622, %v695
  %697 = vmatmul.f32.gmra.mxu0 %v652
  %v698 = vpop.f32.mrf.mxu0
  %v699 = vadd.f32 %v625, %v698
  %700 = vmatmul.f32.gmra.mxu0 %v655
  %v701 = vpop.f32.mrf.mxu0
  %v702 = vadd.f32 %v628, %v701
  %703 = vmatmul.f32.gmra.mxu0 %v658
  %v704 = vpop.f32.mrf.mxu0
  %v705 = vadd.f32 %v631, %v704
  %706 = vmatmul.f32.gmra.mxu0 %v661
  %v707 = vpop.f32.mrf.mxu0
  %v708 = vadd.f32 %v634, %v707
  %709 = vmatmul.f32.gmra.mxu0 %v664
  %v710 = vpop.f32.mrf.mxu0
  %v711 = vadd.f32 %v637, %v710
  %712 = vmatmul.f32.gmra.mxu0 %v667
  %v713 = vpop.f32.mrf.mxu0
  %v714 = vadd.f32 %v640, %v713
  %715 = vmatmul.f32.gmra.mxu0 %v670
  %v716 = vpop.f32.mrf.mxu0
  %v717 = vadd.f32 %v643, %v716
  %718 = vdwg.mxu0
  %s719 = scalar_lea.vmem %s4, 256
  %v720 = vld [vmem:[%s719] sm:$0xff]
  %v721 = vld [vmem:[%s719 + $0x8] sm:$0xff]
  %v722 = vld [vmem:[%s719 + $0x10] sm:$0xff]
  %v723 = vld [vmem:[%s719 + $0x18] sm:$0xff]
  %v724 = vld [vmem:[%s719 + $0x20] sm:$0xff]
  %v725 = vld [vmem:[%s719 + $0x28] sm:$0xff]
  %v726 = vld [vmem:[%s719 + $0x30] sm:$0xff]
  %v727 = vld [vmem:[%s719 + $0x38] sm:$0xff]
  %v728 = vld [vmem:[%s719 + $0x40] sm:$0xff]
  %v729 = vld [vmem:[%s719 + $0x48] sm:$0xff]
  %v730 = vld [vmem:[%s719 + $0x50] sm:$0xff]
  %v731 = vld [vmem:[%s719 + $0x58] sm:$0xff]
  %v732 = vld [vmem:[%s719 + $0x60] sm:$0xff]
  %v733 = vld [vmem:[%s719 + $0x68] sm:$0xff]
  %v734 = vld [vmem:[%s719 + $0x70] sm:$0xff]
  %v735 = vld [vmem:[%s719 + $0x78] sm:$0xff]
  %736 = vmatpush.msra.mxu0 %v735
  %737 = vmatpush.msra.mxu0 %v734
  %738 = vmatpush.msra.mxu0 %v733
  %739 = vmatpush.msra.mxu0 %v732
  %740 = vmatpush.msra.mxu0 %v731
  %741 = vmatpush.msra.mxu0 %v730
  %742 = vmatpush.msra.mxu0 %v729
  %743 = vmatpush.msra.mxu0 %v728
  %744 = vmatpush.msra.mxu0 %v727
  %745 = vmatpush.msra.mxu0 %v726
  %746 = vmatpush.msra.mxu0 %v725
  %747 = vmatpush.msra.mxu0 %v724
  %748 = vmatpush.msra.mxu0 %v723
  %749 = vmatpush.msra.mxu0 %v722
  %750 = vmatpush.msra.mxu0 %v721
  %751 = vmatpush.msra.mxu0 %v720
  %752 = vmatmul.f32.gmra.mxu0 %v448
  %v753 = vpop.f32.mrf.mxu0
  %v754 = vadd.f32 0.0, %v753
  %755 = vmatmul.f32.gmra.mxu0 %v449
  %v756 = vpop.f32.mrf.mxu0
  %v757 = vadd.f32 0.0, %v756
  %758 = vmatmul.f32.gmra.mxu0 %v450
  %v759 = vpop.f32.mrf.mxu0
  %v760 = vadd.f32 0.0, %v759
  %761 = vmatmul.f32.gmra.mxu0 %v451
  %v762 = vpop.f32.mrf.mxu0
  %v763 = vadd.f32 0.0, %v762
  %764 = vmatmul.f32.gmra.mxu0 %v452
  %v765 = vpop.f32.mrf.mxu0
  %v766 = vadd.f32 0.0, %v765
  %767 = vdwg.mxu0
  %s768 = scalar_lea.vmem %s5, 144
  %v769 = vld [vmem:[%s768] sm:$0xff]
  %v770 = vld [vmem:[%s768 + $0x8] sm:$0xff]
  %v771 = vld [vmem:[%s768 + $0x10] sm:$0xff]
  %v772 = vld [vmem:[%s768 + $0x18] sm:$0xff]
  %v773 = vld [vmem:[%s768 + $0x20] sm:$0xff]
  %v774 = vld [vmem:[%s768 + $0x28] sm:$0xff]
  %v775 = vld [vmem:[%s768 + $0x30] sm:$0xff]
  %v776 = vld [vmem:[%s768 + $0x38] sm:$0xff]
  %v777 = vld [vmem:[%s768 + $0x40] sm:$0x3f]
  %v779 = vsel %vm569, %v769, 0
  %v782 = vsel %vm569, %v770, 0
  %v785 = vsel %vm569, %v771, 0
  %v788 = vsel %vm569, %v772, 0
  %v791 = vsel %vm569, %v773, 0
  %v794 = vsel %vm569, %v774, 0
  %v797 = vsel %vm569, %v775, 0
  %v800 = vsel %vm569, %v776, 0
  %v803 = vsel %vm569, %v777, 0
  %v806 = vsel %vm597, %v766, 0
  %808 = vmatpush.msra.mxu0 0.0
  %809 = vmatpush.msra.mxu0 0.0
  %810 = vmatpush.msra.mxu0 0.0
  %811 = vmatpush.msra.mxu0 0.0
  %812 = vmatpush.msra.mxu0 0.0
  %813 = vmatpush.msra.mxu0 0.0
  %814 = vmatpush.msra.mxu0 0.0
  %815 = vmatpush.msra.mxu0 0.0
  %816 = vmatpush.msra.mxu0 0.0
  %817 = vmatpush.msra.mxu0 0.0
  %818 = vmatpush.msra.mxu0 0.0
  %819 = vmatpush.msra.mxu0 %v806
  %820 = vmatpush.msra.mxu0 %v763
  %821 = vmatpush.msra.mxu0 %v760
  %822 = vmatpush.msra.mxu0 %v757
  %823 = vmatpush.msra.mxu0 %v754
  %824 = vmatmul.f32.gmra.mxu0 %v779
  %v825 = vpop.f32.mrf.mxu0
  %v826 = vadd.f32 0.0, %v825
  %827 = vmatmul.f32.gmra.mxu0 %v782
  %v828 = vpop.f32.mrf.mxu0
  %v829 = vadd.f32 0.0, %v828
  %830 = vmatmul.f32.gmra.mxu0 %v785
  %v831 = vpop.f32.mrf.mxu0
  %v832 = vadd.f32 0.0, %v831
  %833 = vmatmul.f32.gmra.mxu0 %v788
  %v834 = vpop.f32.mrf.mxu0
  %v835 = vadd.f32 0.0, %v834
  %836 = vmatmul.f32.gmra.mxu0 %v791
  %v837 = vpop.f32.mrf.mxu0
  %v838 = vadd.f32 0.0, %v837
  %839 = vmatmul.f32.gmra.mxu0 %v794
  %v840 = vpop.f32.mrf.mxu0
  %v841 = vadd.f32 0.0, %v840
  %842 = vmatmul.f32.gmra.mxu0 %v797
  %v843 = vpop.f32.mrf.mxu0
  %v844 = vadd.f32 0.0, %v843
  %845 = vmatmul.f32.gmra.mxu0 %v800
  %v846 = vpop.f32.mrf.mxu0
  %v847 = vadd.f32 0.0, %v846
  %848 = vmatmul.f32.gmra.mxu0 %v803
  %v849 = vpop.f32.mrf.mxu0
  %v850 = vadd.f32 0.0, %v849
  %851 = vdwg.mxu0
  %v852 = vadd.f32 %v693, %v826
  %v853 = vadd.f32 %v696, %v829
  %v854 = vadd.f32 %v699, %v832
  %v855 = vadd.f32 %v702, %v835
  %v856 = vadd.f32 %v705, %v838
  %v857 = vadd.f32 %v708, %v841
  %v858 = vadd.f32 %v711, %v844
  %v859 = vadd.f32 %v714, %v847
  %v860 = vadd.f32 %v717, %v850
  %v861 = vld [vmem:[%s6] sm:$0x1]
  %v863 = vperm.slane %v861, 0
  %v865 = vadd.f32 %v852, %v863
  %v866 = vadd.f32 %v853, %v863
  %v867 = vadd.f32 %v854, %v863
  %v868 = vadd.f32 %v855, %v863
  %v869 = vadd.f32 %v856, %v863
  %v870 = vadd.f32 %v857, %v863
  %v871 = vadd.f32 %v858, %v863
  %v872 = vadd.f32 %v859, %v863
  %v873 = vadd.f32 %v860, %v863
  %v874 = vmax.f32 %v865, 0.0
  %v875 = vmax.f32 %v866, 0.0
  %v876 = vmax.f32 %v867, 0.0
  %v877 = vmax.f32 %v868, 0.0
  %v878 = vmax.f32 %v869, 0.0
  %v879 = vmax.f32 %v870, 0.0
  %v880 = vmax.f32 %v871, 0.0
  %v881 = vmax.f32 %v872, 0.0
  %v882 = vmax.f32 %v873, 0.0
  %v883 = vld [vmem:[%s7] sm:$0xff]
  %v884 = vld [vmem:[%s7 + $0x8] sm:$0xff]
  %v885 = vld [vmem:[%s7 + $0x10] sm:$0xff]
  %v886 = vld [vmem:[%s7 + $0x18] sm:$0xff]
  %v887 = vld [vmem:[%s7 + $0x20] sm:$0xff]
  %v888 = vld [vmem:[%s7 + $0x28] sm:$0xff]
  %v889 = vld [vmem:[%s7 + $0x30] sm:$0xff]
  %v890 = vld [vmem:[%s7 + $0x38] sm:$0xff]
  %vm891 = vcmask 523264
  %v893 = vsel %vm891, %v874, 0
  %v896 = vsel %vm891, %v875, 0
  %v899 = vsel %vm891, %v876, 0
  %v902 = vsel %vm891, %v877, 0
  %v905 = vsel %vm891, %v878, 0
  %v908 = vsel %vm891, %v879, 0
  %v911 = vsel %vm891, %v880, 0
  %v914 = vsel %vm891, %v881, 0
  %v917 = vsel %vm891, %v882, 0
  %919 = vmatpush.msra.mxu0 0.0
  %920 = vmatpush.msra.mxu0 0.0
  %921 = vmatpush.msra.mxu0 0.0
  %922 = vmatpush.msra.mxu0 0.0
  %923 = vmatpush.msra.mxu0 0.0
  %924 = vmatpush.msra.mxu0 0.0
  %925 = vmatpush.msra.mxu0 0.0
  %926 = vmatpush.msra.mxu0 0.0
  %927 = vmatpush.msra.mxu0 %v890
  %928 = vmatpush.msra.mxu0 %v889
  %929 = vmatpush.msra.mxu0 %v888
  %930 = vmatpush.msra.mxu0 %v887
  %931 = vmatpush.msra.mxu0 %v886
  %932 = vmatpush.msra.mxu0 %v885
  %933 = vmatpush.msra.mxu0 %v884
  %934 = vmatpush.msra.mxu0 %v883
  %935 = vmatmul.f32.gmra.mxu0 %v893
  %v936 = vpop.f32.mrf.mxu0
  %v937 = vadd.f32 0.0, %v936
  %938 = vmatmul.f32.gmra.mxu0 %v896
  %v939 = vpop.f32.mrf.mxu0
  %v940 = vadd.f32 0.0, %v939
  %941 = vmatmul.f32.gmra.mxu0 %v899
  %v942 = vpop.f32.mrf.mxu0
  %v943 = vadd.f32 0.0, %v942
  %944 = vmatmul.f32.gmra.mxu0 %v902
  %v945 = vpop.f32.mrf.mxu0
  %v946 = vadd.f32 0.0, %v945
  %947 = vmatmul.f32.gmra.mxu0 %v905
  %v948 = vpop.f32.mrf.mxu0
  %v949 = vadd.f32 0.0, %v948
  %950 = vmatmul.f32.gmra.mxu0 %v908
  %v951 = vpop.f32.mrf.mxu0
  %v952 = vadd.f32 0.0, %v951
  %953 = vmatmul.f32.gmra.mxu0 %v911
  %v954 = vpop.f32.mrf.mxu0
  %v955 = vadd.f32 0.0, %v954
  %956 = vmatmul.f32.gmra.mxu0 %v914
  %v957 = vpop.f32.mrf.mxu0
  %v958 = vadd.f32 0.0, %v957
  %959 = vmatmul.f32.gmra.mxu0 %v917
  %v960 = vpop.f32.mrf.mxu0
  %v961 = vadd.f32 0.0, %v960
  %962 = vdwg.mxu0
  %v963 = vld [vmem:[%s8] sm:$0xff]
  %v964 = vld [vmem:[%s8 + $0x8] sm:$0xff]
  %v965 = vld [vmem:[%s8 + $0x10] sm:$0xff]
  %v966 = vld [vmem:[%s8 + $0x18] sm:$0xff]
  %v967 = vld [vmem:[%s8 + $0x20] sm:$0xff]
  %v968 = vld [vmem:[%s8 + $0x28] sm:$0xff]
  %v969 = vld [vmem:[%s8 + $0x30] sm:$0xff]
  %v970 = vld [vmem:[%s8 + $0x38] sm:$0xff]
  %v971 = vld [vmem:[%s8 + $0x40] sm:$0xff]
  %v972 = vld [vmem:[%s8 + $0x48] sm:$0xff]
  %v973 = vld [vmem:[%s8 + $0x50] sm:$0xff]
  %v974 = vld [vmem:[%s8 + $0x58] sm:$0xff]
  %v975 = vld [vmem:[%s8 + $0x60] sm:$0xff]
  %v976 = vld [vmem:[%s8 + $0x68] sm:$0xff]
  %v977 = vld [vmem:[%s8 + $0x70] sm:$0xff]
  %v978 = vld [vmem:[%s8 + $0x78] sm:$0xff]
  %v979 = vld [vmem:[%s8 + $0x80] sm:$0xff]
  %v980 = vld [vmem:[%s8 + $0x88] sm:$0x3f]
  %s981 = scalar_lea.vmem %s7, 64
  %v982 = vld [vmem:[%s981] sm:$0xff]
  %v983 = vld [vmem:[%s981 + $0x8] sm:$0xff]
  %v984 = vld [vmem:[%s981 + $0x10] sm:$0xff]
  %v985 = vld [vmem:[%s981 + $0x18] sm:$0xff]
  %v986 = vld [vmem:[%s981 + $0x20] sm:$0xff]
  %v987 = vld [vmem:[%s981 + $0x28] sm:$0xff]
  %v988 = vld [vmem:[%s981 + $0x30] sm:$0xff]
  %v989 = vld [vmem:[%s981 + $0x38] sm:$0xff]
  %990 = vmatpush.msra.mxu0 0.0
  %991 = vmatpush.msra.mxu0 0.0
  %992 = vmatpush.msra.mxu0 0.0
  %993 = vmatpush.msra.mxu0 0.0
  %994 = vmatpush.msra.mxu0 0.0
  %995 = vmatpush.msra.mxu0 0.0
  %996 = vmatpush.msra.mxu0 0.0
  %997 = vmatpush.msra.mxu0 0.0
  %998 = vmatpush.msra.mxu0 %v989
  %999 = vmatpush.msra.mxu0 %v988
  %1000 = vmatpush.msra.mxu0 %v987
  %1001 = vmatpush.msra.mxu0 %v986
  %1002 = vmatpush.msra.mxu0 %v985
  %1003 = vmatpush.msra.mxu0 %v984
  %1004 = vmatpush.msra.mxu0 %v983
  %1005 = vmatpush.msra.mxu0 %v982
  %1006 = vmatmul.f32.gmra.mxu0 %v893
  %v1007 = vpop.f32.mrf.mxu0
  %v1008 = vadd.f32 0.0, %v1007
  %1009 = vmatmul.f32.gmra.mxu0 %v896
  %v1010 = vpop.f32.mrf.mxu0
  %v1011 = vadd.f32 0.0, %v1010
  %1012 = vmatmul.f32.gmra.mxu0 %v899
  %v1013 = vpop.f32.mrf.mxu0
  %v1014 = vadd.f32 0.0, %v1013
  %1015 = vmatmul.f32.gmra.mxu0 %v902
  %v1016 = vpop.f32.mrf.mxu0
  %v1017 = vadd.f32 0.0, %v1016
  %1018 = vmatmul.f32.gmra.mxu0 %v905
  %v1019 = vpop.f32.mrf.mxu0
  %v1020 = vadd.f32 0.0, %v1019
  %1021 = vmatmul.f32.gmra.mxu0 %v908
  %v1022 = vpop.f32.mrf.mxu0
  %v1023 = vadd.f32 0.0, %v1022
  %1024 = vmatmul.f32.gmra.mxu0 %v911
  %v1025 = vpop.f32.mrf.mxu0
  %v1026 = vadd.f32 0.0, %v1025
  %1027 = vmatmul.f32.gmra.mxu0 %v914
  %v1028 = vpop.f32.mrf.mxu0
  %v1029 = vadd.f32 0.0, %v1028
  %1030 = vmatmul.f32.gmra.mxu0 %v917
  %v1031 = vpop.f32.mrf.mxu0
  %v1032 = vadd.f32 0.0, %v1031
  %1033 = vdwg.mxu0
  %s1034 = scalar_lea.vmem %s8, 144
  %v1035 = vld [vmem:[%s1034] sm:$0xff]
  %v1036 = vld [vmem:[%s1034 + $0x8] sm:$0xff]
  %v1037 = vld [vmem:[%s1034 + $0x10] sm:$0xff]
  %v1038 = vld [vmem:[%s1034 + $0x18] sm:$0xff]
  %v1039 = vld [vmem:[%s1034 + $0x20] sm:$0xff]
  %v1040 = vld [vmem:[%s1034 + $0x28] sm:$0xff]
  %v1041 = vld [vmem:[%s1034 + $0x30] sm:$0xff]
  %v1042 = vld [vmem:[%s1034 + $0x38] sm:$0xff]
  %v1043 = vld [vmem:[%s1034 + $0x40] sm:$0xff]
  %v1044 = vld [vmem:[%s1034 + $0x48] sm:$0xff]
  %v1045 = vld [vmem:[%s1034 + $0x50] sm:$0xff]
  %v1046 = vld [vmem:[%s1034 + $0x58] sm:$0xff]
  %v1047 = vld [vmem:[%s1034 + $0x60] sm:$0xff]
  %v1048 = vld [vmem:[%s1034 + $0x68] sm:$0xff]
  %v1049 = vld [vmem:[%s1034 + $0x70] sm:$0xff]
  %v1050 = vld [vmem:[%s1034 + $0x78] sm:$0xff]
  %v1051 = vld [vmem:[%s1034 + $0x80] sm:$0xff]
  %v1052 = vld [vmem:[%s1034 + $0x88] sm:$0x3f]
  %vm1053 = vcmask 572416
  %v1055 = vsel %vm1053, %v1035, 0
  %v1058 = vsel %vm1053, %v1036, 0
  %v1061 = vsel %vm1053, %v1037, 0
  %v1064 = vsel %vm1053, %v1038, 0
  %v1067 = vsel %vm1053, %v1039, 0
  %v1070 = vsel %vm1053, %v1040, 0
  %v1073 = vsel %vm1053, %v1041, 0
  %v1076 = vsel %vm1053, %v1042, 0
  %v1079 = vsel %vm1053, %v1043, 0
  %v1082 = vsel %vm1053, %v1044, 0
  %v1085 = vsel %vm1053, %v1045, 0
  %v1088 = vsel %vm1053, %v1046, 0
  %v1091 = vsel %vm1053, %v1047, 0
  %v1094 = vsel %vm1053, %v1048, 0
  %v1097 = vsel %vm1053, %v1049, 0
  %v1100 = vsel %vm1053, %v1050, 0
  %v1103 = vsel %vm1053, %v1051, 0
  %v1106 = vsel %vm1053, %v1052, 0
  %vm1108 = vcmask 1045504
  %v1110 = vsel %vm1108, %v1032, 0
  %1112 = vmatpush.msra.mxu0 0.0
  %1113 = vmatpush.msra.mxu0 0.0
  %1114 = vmatpush.msra.mxu0 0.0
  %1115 = vmatpush.msra.mxu0 0.0
  %1116 = vmatpush.msra.mxu0 0.0
  %1117 = vmatpush.msra.mxu0 0.0
  %1118 = vmatpush.msra.mxu0 0.0
  %1119 = vmatpush.msra.mxu0 %v1110
  %1120 = vmatpush.msra.mxu0 %v1029
  %1121 = vmatpush.msra.mxu0 %v1026
  %1122 = vmatpush.msra.mxu0 %v1023
  %1123 = vmatpush.msra.mxu0 %v1020
  %1124 = vmatpush.msra.mxu0 %v1017
  %1125 = vmatpush.msra.mxu0 %v1014
  %1126 = vmatpush.msra.mxu0 %v1011
  %1127 = vmatpush.msra.mxu0 %v1008
  %1128 = vmatmul.f32.gmra.mxu0 %v1055
  %v1129 = vpop.f32.mrf.mxu0
  %v1130 = vadd.f32 0.0, %v1129
  %1131 = vmatmul.f32.gmra.mxu0 %v1058
  %v1132 = vpop.f32.mrf.mxu0
  %v1133 = vadd.f32 0.0, %v1132
  %1134 = vmatmul.f32.gmra.mxu0 %v1061
  %v1135 = vpop.f32.mrf.mxu0
  %v1136 = vadd.f32 0.0, %v1135
  %1137 = vmatmul.f32.gmra.mxu0 %v1064
  %v1138 = vpop.f32.mrf.mxu0
  %v1139 = vadd.f32 0.0, %v1138
  %1140 = vmatmul.f32.gmra.mxu0 %v1067
  %v1141 = vpop.f32.mrf.mxu0
  %v1142 = vadd.f32 0.0, %v1141
  %1143 = vmatmul.f32.gmra.mxu0 %v1070
  %v1144 = vpop.f32.mrf.mxu0
  %v1145 = vadd.f32 0.0, %v1144
  %1146 = vmatmul.f32.gmra.mxu0 %v1073
  %v1147 = vpop.f32.mrf.mxu0
  %v1148 = vadd.f32 0.0, %v1147
  %1149 = vmatmul.f32.gmra.mxu0 %v1076
  %v1150 = vpop.f32.mrf.mxu0
  %v1151 = vadd.f32 0.0, %v1150
  %1152 = vmatmul.f32.gmra.mxu0 %v1079
  %v1153 = vpop.f32.mrf.mxu0
  %v1154 = vadd.f32 0.0, %v1153
  %1155 = vmatmul.f32.gmra.mxu0 %v1082
  %v1156 = vpop.f32.mrf.mxu0
  %v1157 = vadd.f32 0.0, %v1156
  %1158 = vmatmul.f32.gmra.mxu0 %v1085
  %v1159 = vpop.f32.mrf.mxu0
  %v1160 = vadd.f32 0.0, %v1159
  %1161 = vmatmul.f32.gmra.mxu0 %v1088
  %v1162 = vpop.f32.mrf.mxu0
  %v1163 = vadd.f32 0.0, %v1162
  %1164 = vmatmul.f32.gmra.mxu0 %v1091
  %v1165 = vpop.f32.mrf.mxu0
  %v1166 = vadd.f32 0.0, %v1165
  %1167 = vmatmul.f32.gmra.mxu0 %v1094
  %v1168 = vpop.f32.mrf.mxu0
  %v1169 = vadd.f32 0.0, %v1168
  %1170 = vmatmul.f32.gmra.mxu0 %v1097
  %v1171 = vpop.f32.mrf.mxu0
  %v1172 = vadd.f32 0.0, %v1171
  %1173 = vmatmul.f32.gmra.mxu0 %v1100
  %v1174 = vpop.f32.mrf.mxu0
  %v1175 = vadd.f32 0.0, %v1174
  %1176 = vmatmul.f32.gmra.mxu0 %v1103
  %v1177 = vpop.f32.mrf.mxu0
  %v1178 = vadd.f32 0.0, %v1177
  %1179 = vmatmul.f32.gmra.mxu0 %v1106
  %v1180 = vpop.f32.mrf.mxu0
  %v1181 = vadd.f32 0.0, %v1180
  %1182 = vdwg.mxu0
  %v1184 = vsel %vm1053, %v963, 0
  %v1187 = vsel %vm1053, %v964, 0
  %v1190 = vsel %vm1053, %v965, 0
  %v1193 = vsel %vm1053, %v966, 0
  %v1196 = vsel %vm1053, %v967, 0
  %v1199 = vsel %vm1053, %v968, 0
  %v1202 = vsel %vm1053, %v969, 0
  %v1205 = vsel %vm1053, %v970, 0
  %v1208 = vsel %vm1053, %v971, 0
  %v1211 = vsel %vm1053, %v972, 0
  %v1214 = vsel %vm1053, %v973, 0
  %v1217 = vsel %vm1053, %v974, 0
  %v1220 = vsel %vm1053, %v975, 0
  %v1223 = vsel %vm1053, %v976, 0
  %v1226 = vsel %vm1053, %v977, 0
  %v1229 = vsel %vm1053, %v978, 0
  %v1232 = vsel %vm1053, %v979, 0
  %v1235 = vsel %vm1053, %v980, 0
  %v1238 = vsel %vm1108, %v961, 0
  %1240 = vmatpush.msra.mxu0 0.0
  %1241 = vmatpush.msra.mxu0 0.0
  %1242 = vmatpush.msra.mxu0 0.0
  %1243 = vmatpush.msra.mxu0 0.0
  %1244 = vmatpush.msra.mxu0 0.0
  %1245 = vmatpush.msra.mxu0 0.0
  %1246 = vmatpush.msra.mxu0 0.0
  %1247 = vmatpush.msra.mxu0 %v1238
  %1248 = vmatpush.msra.mxu0 %v958
  %1249 = vmatpush.msra.mxu0 %v955
  %1250 = vmatpush.msra.mxu0 %v952
  %1251 = vmatpush.msra.mxu0 %v949
  %1252 = vmatpush.msra.mxu0 %v946
  %1253 = vmatpush.msra.mxu0 %v943
  %1254 = vmatpush.msra.mxu0 %v940
  %1255 = vmatpush.msra.mxu0 %v937
  %1256 = vmatmul.f32.gmra.mxu0 %v1184
  %v1257 = vpop.f32.mrf.mxu0
  %v1258 = vadd.f32 %v1130, %v1257
  %1259 = vmatmul.f32.gmra.mxu0 %v1187
  %v1260 = vpop.f32.mrf.mxu0
  %v1261 = vadd.f32 %v1133, %v1260
  %1262 = vmatmul.f32.gmra.mxu0 %v1190
  %v1263 = vpop.f32.mrf.mxu0
  %v1264 = vadd.f32 %v1136, %v1263
  %1265 = vmatmul.f32.gmra.mxu0 %v1193
  %v1266 = vpop.f32.mrf.mxu0
  %v1267 = vadd.f32 %v1139, %v1266
  %1268 = vmatmul.f32.gmra.mxu0 %v1196
  %v1269 = vpop.f32.mrf.mxu0
  %v1270 = vadd.f32 %v1142, %v1269
  %1271 = vmatmul.f32.gmra.mxu0 %v1199
  %v1272 = vpop.f32.mrf.mxu0
  %v1273 = vadd.f32 %v1145, %v1272
  %1274 = vmatmul.f32.gmra.mxu0 %v1202
  %v1275 = vpop.f32.mrf.mxu0
  %v1276 = vadd.f32 %v1148, %v1275
  %1277 = vmatmul.f32.gmra.mxu0 %v1205
  %v1278 = vpop.f32.mrf.mxu0
  %v1279 = vadd.f32 %v1151, %v1278
  %1280 = vmatmul.f32.gmra.mxu0 %v1208
  %v1281 = vpop.f32.mrf.mxu0
  %v1282 = vadd.f32 %v1154, %v1281
  %1283 = vmatmul.f32.gmra.mxu0 %v1211
  %v1284 = vpop.f32.mrf.mxu0
  %v1285 = vadd.f32 %v1157, %v1284
  %1286 = vmatmul.f32.gmra.mxu0 %v1214
  %v1287 = vpop.f32.mrf.mxu0
  %v1288 = vadd.f32 %v1160, %v1287
  %1289 = vmatmul.f32.gmra.mxu0 %v1217
  %v1290 = vpop.f32.mrf.mxu0
  %v1291 = vadd.f32 %v1163, %v1290
  %1292 = vmatmul.f32.gmra.mxu0 %v1220
  %v1293 = vpop.f32.mrf.mxu0
  %v1294 = vadd.f32 %v1166, %v1293
  %1295 = vmatmul.f32.gmra.mxu0 %v1223
  %v1296 = vpop.f32.mrf.mxu0
  %v1297 = vadd.f32 %v1169, %v1296
  %1298 = vmatmul.f32.gmra.mxu0 %v1226
  %v1299 = vpop.f32.mrf.mxu0
  %v1300 = vadd.f32 %v1172, %v1299
  %1301 = vmatmul.f32.gmra.mxu0 %v1229
  %v1302 = vpop.f32.mrf.mxu0
  %v1303 = vadd.f32 %v1175, %v1302
  %1304 = vmatmul.f32.gmra.mxu0 %v1232
  %v1305 = vpop.f32.mrf.mxu0
  %v1306 = vadd.f32 %v1178, %v1305
  %1307 = vmatmul.f32.gmra.mxu0 %v1235
  %v1308 = vpop.f32.mrf.mxu0
  %v1309 = vadd.f32 %v1181, %v1308
  %1310 = vdwg.mxu0
  %s1311 = scalar_lea.vmem %s7, 128
  %v1312 = vld [vmem:[%s1311] sm:$0xff]
  %v1313 = vld [vmem:[%s1311 + $0x8] sm:$0xff]
  %v1314 = vld [vmem:[%s1311 + $0x10] sm:$0xff]
  %v1315 = vld [vmem:[%s1311 + $0x18] sm:$0xff]
  %v1316 = vld [vmem:[%s1311 + $0x20] sm:$0xff]
  %v1317 = vld [vmem:[%s1311 + $0x28] sm:$0xff]
  %v1318 = vld [vmem:[%s1311 + $0x30] sm:$0xff]
  %v1319 = vld [vmem:[%s1311 + $0x38] sm:$0xff]
  %1320 = vmatpush.msra.mxu0 0.0
  %1321 = vmatpush.msra.mxu0 0.0
  %1322 = vmatpush.msra.mxu0 0.0
  %1323 = vmatpush.msra.mxu0 0.0
  %1324 = vmatpush.msra.mxu0 0.0
  %1325 = vmatpush.msra.mxu0 0.0
  %1326 = vmatpush.msra.mxu0 0.0
  %1327 = vmatpush.msra.mxu0 0.0
  %1328 = vmatpush.msra.mxu0 %v1319
  %1329 = vmatpush.msra.mxu0 %v1318
  %1330 = vmatpush.msra.mxu0 %v1317
  %1331 = vmatpush.msra.mxu0 %v1316
  %1332 = vmatpush.msra.mxu0 %v1315
  %1333 = vmatpush.msra.mxu0 %v1314
  %1334 = vmatpush.msra.mxu0 %v1313
  %1335 = vmatpush.msra.mxu0 %v1312
  %1336 = vmatmul.f32.gmra.mxu0 %v893
  %v1337 = vpop.f32.mrf.mxu0
  %v1338 = vadd.f32 0.0, %v1337
  %1339 = vmatmul.f32.gmra.mxu0 %v896
  %v1340 = vpop.f32.mrf.mxu0
  %v1341 = vadd.f32 0.0, %v1340
  %1342 = vmatmul.f32.gmra.mxu0 %v899
  %v1343 = vpop.f32.mrf.mxu0
  %v1344 = vadd.f32 0.0, %v1343
  %1345 = vmatmul.f32.gmra.mxu0 %v902
  %v1346 = vpop.f32.mrf.mxu0
  %v1347 = vadd.f32 0.0, %v1346
  %1348 = vmatmul.f32.gmra.mxu0 %v905
  %v1349 = vpop.f32.mrf.mxu0
  %v1350 = vadd.f32 0.0, %v1349
  %1351 = vmatmul.f32.gmra.mxu0 %v908
  %v1352 = vpop.f32.mrf.mxu0
  %v1353 = vadd.f32 0.0, %v1352
  %1354 = vmatmul.f32.gmra.mxu0 %v911
  %v1355 = vpop.f32.mrf.mxu0
  %v1356 = vadd.f32 0.0, %v1355
  %1357 = vmatmul.f32.gmra.mxu0 %v914
  %v1358 = vpop.f32.mrf.mxu0
  %v1359 = vadd.f32 0.0, %v1358
  %1360 = vmatmul.f32.gmra.mxu0 %v917
  %v1361 = vpop.f32.mrf.mxu0
  %v1362 = vadd.f32 0.0, %v1361
  %1363 = vdwg.mxu0
  %s1364 = scalar_lea.vmem %s8, 288
  %v1365 = vld [vmem:[%s1364] sm:$0xff]
  %v1366 = vld [vmem:[%s1364 + $0x8] sm:$0xff]
  %v1367 = vld [vmem:[%s1364 + $0x10] sm:$0xff]
  %v1368 = vld [vmem:[%s1364 + $0x18] sm:$0xff]
  %v1369 = vld [vmem:[%s1364 + $0x20] sm:$0xff]
  %v1370 = vld [vmem:[%s1364 + $0x28] sm:$0xff]
  %v1371 = vld [vmem:[%s1364 + $0x30] sm:$0xff]
  %v1372 = vld [vmem:[%s1364 + $0x38] sm:$0xff]
  %v1373 = vld [vmem:[%s1364 + $0x40] sm:$0xff]
  %v1374 = vld [vmem:[%s1364 + $0x48] sm:$0xff]
  %v1375 = vld [vmem:[%s1364 + $0x50] sm:$0xff]
  %v1376 = vld [vmem:[%s1364 + $0x58] sm:$0xff]
  %v1377 = vld [vmem:[%s1364 + $0x60] sm:$0xff]
  %v1378 = vld [vmem:[%s1364 + $0x68] sm:$0xff]
  %v1379 = vld [vmem:[%s1364 + $0x70] sm:$0xff]
  %v1380 = vld [vmem:[%s1364 + $0x78] sm:$0xff]
  %v1381 = vld [vmem:[%s1364 + $0x80] sm:$0xff]
  %v1382 = vld [vmem:[%s1364 + $0x88] sm:$0x3f]
  %v1384 = vsel %vm1053, %v1365, 0
  %v1387 = vsel %vm1053, %v1366, 0
  %v1390 = vsel %vm1053, %v1367, 0
  %v1393 = vsel %vm1053, %v1368, 0
  %v1396 = vsel %vm1053, %v1369, 0
  %v1399 = vsel %vm1053, %v1370, 0
  %v1402 = vsel %vm1053, %v1371, 0
  %v1405 = vsel %vm1053, %v1372, 0
  %v1408 = vsel %vm1053, %v1373, 0
  %v1411 = vsel %vm1053, %v1374, 0
  %v1414 = vsel %vm1053, %v1375, 0
  %v1417 = vsel %vm1053, %v1376, 0
  %v1420 = vsel %vm1053, %v1377, 0
  %v1423 = vsel %vm1053, %v1378, 0
  %v1426 = vsel %vm1053, %v1379, 0
  %v1429 = vsel %vm1053, %v1380, 0
  %v1432 = vsel %vm1053, %v1381, 0
  %v1435 = vsel %vm1053, %v1382, 0
  %v1438 = vsel %vm1108, %v1362, 0
  %1440 = vmatpush.msra.mxu0 0.0
  %1441 = vmatpush.msra.mxu0 0.0
  %1442 = vmatpush.msra.mxu0 0.0
  %1443 = vmatpush.msra.mxu0 0.0
  %1444 = vmatpush.msra.mxu0 0.0
  %1445 = vmatpush.msra.mxu0 0.0
  %1446 = vmatpush.msra.mxu0 0.0
  %1447 = vmatpush.msra.mxu0 %v1438
  %1448 = vmatpush.msra.mxu0 %v1359
  %1449 = vmatpush.msra.mxu0 %v1356
  %1450 = vmatpush.msra.mxu0 %v1353
  %1451 = vmatpush.msra.mxu0 %v1350
  %1452 = vmatpush.msra.mxu0 %v1347
  %1453 = vmatpush.msra.mxu0 %v1344
  %1454 = vmatpush.msra.mxu0 %v1341
  %1455 = vmatpush.msra.mxu0 %v1338
  %1456 = vmatmul.f32.gmra.mxu0 %v1384
  %v1457 = vpop.f32.mrf.mxu0
  %v1458 = vadd.f32 0.0, %v1457
  %1459 = vmatmul.f32.gmra.mxu0 %v1387
  %v1460 = vpop.f32.mrf.mxu0
  %v1461 = vadd.f32 0.0, %v1460
  %1462 = vmatmul.f32.gmra.mxu0 %v1390
  %v1463 = vpop.f32.mrf.mxu0
  %v1464 = vadd.f32 0.0, %v1463
  %1465 = vmatmul.f32.gmra.mxu0 %v1393
  %v1466 = vpop.f32.mrf.mxu0
  %v1467 = vadd.f32 0.0, %v1466
  %1468 = vmatmul.f32.gmra.mxu0 %v1396
  %v1469 = vpop.f32.mrf.mxu0
  %v1470 = vadd.f32 0.0, %v1469
  %1471 = vmatmul.f32.gmra.mxu0 %v1399
  %v1472 = vpop.f32.mrf.mxu0
  %v1473 = vadd.f32 0.0, %v1472
  %1474 = vmatmul.f32.gmra.mxu0 %v1402
  %v1475 = vpop.f32.mrf.mxu0
  %v1476 = vadd.f32 0.0, %v1475
  %1477 = vmatmul.f32.gmra.mxu0 %v1405
  %v1478 = vpop.f32.mrf.mxu0
  %v1479 = vadd.f32 0.0, %v1478
  %1480 = vmatmul.f32.gmra.mxu0 %v1408
  %v1481 = vpop.f32.mrf.mxu0
  %v1482 = vadd.f32 0.0, %v1481
  %1483 = vmatmul.f32.gmra.mxu0 %v1411
  %v1484 = vpop.f32.mrf.mxu0
  %v1485 = vadd.f32 0.0, %v1484
  %1486 = vmatmul.f32.gmra.mxu0 %v1414
  %v1487 = vpop.f32.mrf.mxu0
  %v1488 = vadd.f32 0.0, %v1487
  %1489 = vmatmul.f32.gmra.mxu0 %v1417
  %v1490 = vpop.f32.mrf.mxu0
  %v1491 = vadd.f32 0.0, %v1490
  %1492 = vmatmul.f32.gmra.mxu0 %v1420
  %v1493 = vpop.f32.mrf.mxu0
  %v1494 = vadd.f32 0.0, %v1493
  %1495 = vmatmul.f32.gmra.mxu0 %v1423
  %v1496 = vpop.f32.mrf.mxu0
  %v1497 = vadd.f32 0.0, %v1496
  %1498 = vmatmul.f32.gmra.mxu0 %v1426
  %v1499 = vpop.f32.mrf.mxu0
  %v1500 = vadd.f32 0.0, %v1499
  %1501 = vmatmul.f32.gmra.mxu0 %v1429
  %v1502 = vpop.f32.mrf.mxu0
  %v1503 = vadd.f32 0.0, %v1502
  %1504 = vmatmul.f32.gmra.mxu0 %v1432
  %v1505 = vpop.f32.mrf.mxu0
  %v1506 = vadd.f32 0.0, %v1505
  %1507 = vmatmul.f32.gmra.mxu0 %v1435
  %v1508 = vpop.f32.mrf.mxu0
  %v1509 = vadd.f32 0.0, %v1508
  %1510 = vdwg.mxu0
  %v1511 = vadd.f32 %v1258, %v1458
  %v1512 = vadd.f32 %v1261, %v1461
  %v1513 = vadd.f32 %v1264, %v1464
  %v1514 = vadd.f32 %v1267, %v1467
  %v1515 = vadd.f32 %v1270, %v1470
  %v1516 = vadd.f32 %v1273, %v1473
  %v1517 = vadd.f32 %v1276, %v1476
  %v1518 = vadd.f32 %v1279, %v1479
  %v1519 = vadd.f32 %v1282, %v1482
  %v1520 = vadd.f32 %v1285, %v1485
  %v1521 = vadd.f32 %v1288, %v1488
  %v1522 = vadd.f32 %v1291, %v1491
  %v1523 = vadd.f32 %v1294, %v1494
  %v1524 = vadd.f32 %v1297, %v1497
  %v1525 = vadd.f32 %v1300, %v1500
  %v1526 = vadd.f32 %v1303, %v1503
  %v1527 = vadd.f32 %v1306, %v1506
  %v1528 = vadd.f32 %v1309, %v1509
  %v1529 = vld [vmem:[%s9] sm:$0x1]
  %v1531 = vperm.slane %v1529, 0
  %v1533 = vadd.f32 %v1511, %v1531
  %v1534 = vadd.f32 %v1512, %v1531
  %v1535 = vadd.f32 %v1513, %v1531
  %v1536 = vadd.f32 %v1514, %v1531
  %v1537 = vadd.f32 %v1515, %v1531
  %v1538 = vadd.f32 %v1516, %v1531
  %v1539 = vadd.f32 %v1517, %v1531
  %v1540 = vadd.f32 %v1518, %v1531
  %v1541 = vadd.f32 %v1519, %v1531
  %v1542 = vadd.f32 %v1520, %v1531
  %v1543 = vadd.f32 %v1521, %v1531
  %v1544 = vadd.f32 %v1522, %v1531
  %v1545 = vadd.f32 %v1523, %v1531
  %v1546 = vadd.f32 %v1524, %v1531
  %v1547 = vadd.f32 %v1525, %v1531
  %v1548 = vadd.f32 %v1526, %v1531
  %v1549 = vadd.f32 %v1527, %v1531
  %v1550 = vadd.f32 %v1528, %v1531
  %v1551 = vmax.f32 %v1533, 0.0
  %v1552 = vmax.f32 %v1534, 0.0
  %v1553 = vmax.f32 %v1535, 0.0
  %v1554 = vmax.f32 %v1536, 0.0
  %v1555 = vmax.f32 %v1537, 0.0
  %v1556 = vmax.f32 %v1538, 0.0
  %v1557 = vmax.f32 %v1539, 0.0
  %v1558 = vmax.f32 %v1540, 0.0
  %v1559 = vmax.f32 %v1541, 0.0
  %v1560 = vmax.f32 %v1542, 0.0
  %v1561 = vmax.f32 %v1543, 0.0
  %v1562 = vmax.f32 %v1544, 0.0
  %v1563 = vmax.f32 %v1545, 0.0
  %v1564 = vmax.f32 %v1546, 0.0
  %v1565 = vmax.f32 %v1547, 0.0
  %v1566 = vmax.f32 %v1548, 0.0
  %v1567 = vmax.f32 %v1549, 0.0
  %v1568 = vmax.f32 %v1550, 0.0
  %vm1569 = vcmask 408576
  %1570 = vst.msk [vmem:[%s10] sm:$0xff] %vm1569, %v1551
  %1571 = vst.msk [vmem:[%s10 + $0x8] sm:$0xff] %vm1569, %v1552
  %1572 = vst.msk [vmem:[%s10 + $0x10] sm:$0xff] %vm1569, %v1553
  %1573 = vst.msk [vmem:[%s10 + $0x18] sm:$0xff] %vm1569, %v1554
  %1574 = vst.msk [vmem:[%s10 + $0x20] sm:$0xff] %vm1569, %v1555
  %1575 = vst.msk [vmem:[%s10 + $0x28] sm:$0xff] %vm1569, %v1556
  %1576 = vst.msk [vmem:[%s10 + $0x30] sm:$0xff] %vm1569, %v1557
  %1577 = vst.msk [vmem:[%s10 + $0x38] sm:$0xff] %vm1569, %v1558
  %1578 = vst.msk [vmem:[%s10 + $0x40] sm:$0xff] %vm1569, %v1559
  %1579 = vst.msk [vmem:[%s10 + $0x48] sm:$0xff] %vm1569, %v1560
  %1580 = vst.msk [vmem:[%s10 + $0x50] sm:$0xff] %vm1569, %v1561
  %1581 = vst.msk [vmem:[%s10 + $0x58] sm:$0xff] %vm1569, %v1562
  %1582 = vst.msk [vmem:[%s10 + $0x60] sm:$0xff] %vm1569, %v1563
  %1583 = vst.msk [vmem:[%s10 + $0x68] sm:$0xff] %vm1569, %v1564
  %1584 = vst.msk [vmem:[%s10 + $0x70] sm:$0xff] %vm1569, %v1565
  %1585 = vst.msk [vmem:[%s10 + $0x78] sm:$0xff] %vm1569, %v1566
  %1586 = vst.msk [vmem:[%s10 + $0x80] sm:$0xff] %vm1569, %v1567
  %vm1587 = vcmask 406528
  %1588 = vst.msk [vmem:[%s10 + $0x88] sm:$0x3f] %vm1587, %v1568
  // Predicated region
  $region42: #{tpu_custom_call.1} parent=0 // pred_check
    _
  $region43: #{tpu_custom_call.1} parent=0 // pred_check_branch
    %1590 = sbr.rel (0) target = $region45
  $region44: #{tpu_custom_call.1} parent=0 // pred_region
    _
  $region45: #{tpu_custom_call.1} parent=0 // pred_fallthru
    _
  // Predicated region
  $region46: #{tpu_custom_call.1} parent=0 // pred_check
    _
  $region47: #{tpu_custom_call.1} parent=0 // pred_check_branch
    %1592 = sbr.rel (0) target = $region49
  $region48: #{tpu_custom_call.1} parent=0 // pred_region
    _
  $region49: #{tpu_custom_call.1} parent=0 // pred_fallthru
    _

</llo_original>
